<compile_context>
chip_gen: v7x
topology: tpu7x:2x2x1
jax: 0.10.0
libtpu: 0.0.40
codegen_flags: <defaults>
</compile_context>

<pallas_src>
import functools

import jax
import jax.numpy as jnp
from jax.experimental import pallas as pl
from jax.experimental.pallas import tpu as pltpu


def _pool_kernel(x_ref, sum_ref, max_ref, *, total_s, s_tile, num_s):
    # x_ref:   (1, C4, s_tile)  one batch element, C*4 collapsed rows, one spatial tile
    # sum_ref: (1, 1, C4) f32   running sum (scaled to mean at finalize), resident output
    # max_ref: (1, 1, C4) f32   running max, resident output
    s = pl.program_id(1)

    @pl.when(s == 0)
    def _init():
        sum_ref[...] = jnp.zeros(sum_ref.shape, jnp.float32)
        max_ref[...] = jnp.full(max_ref.shape, -jnp.inf, jnp.float32)

    x = x_ref[0]                                   # (C4, s_tile)
    rem = total_s - (num_s - 1) * s_tile           # size of the last (possibly partial) tile

    def _accumulate(xs, xm):
        sum_ref[0, 0, :] = sum_ref[0, 0, :] + jnp.sum(xs, axis=-1)
        max_ref[0, 0, :] = jnp.maximum(max_ref[0, 0, :], jnp.max(xm, axis=-1))

    if rem == s_tile:
        # S is a multiple of s_tile: every tile is a pure fused load + reduce.
        _accumulate(x, x)
    else:
        # Only the last tile pays for masking; steady-state tiles take the plain path.
        @pl.when(s < num_s - 1)
        def _full_tile():
            _accumulate(x, x)

        @pl.when(s == num_s - 1)
        def _partial_tile():
            valid = jax.lax.broadcasted_iota(jnp.int32, (1, s_tile), 1) < rem
            _accumulate(jnp.where(valid, x, 0.0), jnp.where(valid, x, -jnp.inf))

    @pl.when(s == num_s - 1)
    def _finalize():
        # Scale the running sum to a mean once per batch element (not per tile).
        sum_ref[...] = sum_ref[...] * (1.0 / float(total_s))


def _generation_params():
    """(per-block byte budget, scoped vmem_limit_bytes) chosen per TPU generation."""
    phys = 64 * 1024 * 1024
    try:
        phys = int(getattr(pltpu.get_tpu_info(), "vmem_capacity_bytes", phys))
    except Exception:
        pass
    if phys >= 96 * 1024 * 1024:
        # v5e / v6e: 128 MiB physical VMEM -> big pipelined blocks, generous limit.
        return 12 * 1024 * 1024, 64 * 1024 * 1024
    # v7x: 64 MiB physical VMEM per TensorCore -> leave headroom under it.
    return 10 * 1024 * 1024, 44 * 1024 * 1024


def _pick_s_tile(S, C4, block_budget):
    # Block is (C4, s_tile) f32 (sublane dim padded to a multiple of 8).  Keep each
    # (double-buffered) block within ~block_budget so the DMA is long enough to hide
    # the ~0.35 us per-grid-step overhead without blowing scoped VMEM.
    rows = ((C4 + 7) // 8) * 8
    cap = (block_budget // (rows * 4)) // 128 * 128
    # Lane-tile floor.  For extremely large C (C*4 >~ 10k) this floor can exceed the
    # budget; it still fits the raised vmem_limit chosen in _generation_params().
    cap = max(cap, 128)
    if S <= cap:
        return S               # single full-extent block (legal for any S)
    return cap                 # multiple of 128; cdiv grid + last-tile mask handles remainder


def channel_attention(x, fc1_w, fc2_w, *, s_tile=None):
    """x: (N, C, D, H, W) f32; fc1_w: (Cr, C, 1, 1, 1); fc2_w: (C, Cr, 1, 1, 1)."""
    N, C, D, H, W = x.shape
    Cr = fc1_w.shape[0]
    # TODO(synk): PyTorch AdaptiveAvg/MaxPool3d((4,1,1)) handles D % 4 != 0 with uneven
    # bins; only the even-bin case is implemented here.
    assert D % 4 == 0, "AdaptiveAvg/MaxPool3d((4,1,1)) implemented for D % 4 == 0"
    S = (D // 4) * H * W
    C4 = C * 4

    # Pure metadata reshape of contiguous NCDHW -> (N, C*4, S): row index is 4*c + bin,
    # no HBM transpose/relayout and no padded 4-sublane dim in the streamed blocks.
    x_r = x.reshape(N, C4, S)

    block_budget, vmem_limit = _generation_params()
    if s_tile is None:
        s_tile = _pick_s_tile(S, C4, block_budget)
    assert s_tile <= S and (s_tile == S or s_tile % 128 == 0), \
        "s_tile must be <= S and either S or a multiple of 128"
    num_s = pl.cdiv(S, s_tile)

    kernel = functools.partial(_pool_kernel, total_s=S, s_tile=s_tile, num_s=num_s)

    # TODO(synk): when N == 1 only one v7x TensorCore streams (the sole "parallel" axis
    # is N); a parallel grid axis over C4 chunks would drive both HBM streams.
    pooled_avg, pooled_max = pl.pallas_call(
        kernel,
        out_shape=(jax.ShapeDtypeStruct((N, 1, C4), jnp.float32),
                   jax.ShapeDtypeStruct((N, 1, C4), jnp.float32)),
        grid_spec=pltpu.PrefetchScalarGridSpec(
            num_scalar_prefetch=0,
            grid=(N, num_s),
            in_specs=[
                # Note: for very large C with short s_tile on v5e, pipeline_mode=
                # pl.Buffered(3) here can hide many-descriptor strided-DMA latency;
                # left at the default depth of 2 to keep VMEM use minimal.
                pl.BlockSpec((1, C4, s_tile), lambda n, s: (n, 0, s)),
            ],
            out_specs=[
                pl.BlockSpec((1, 1, C4), lambda n, s: (n, 0, 0)),
                pl.BlockSpec((1, 1, C4), lambda n, s: (n, 0, 0)),
            ],
        ),
        compiler_params=pltpu.CompilerParams(
            dimension_semantics=("parallel", "arbitrary"),
            vmem_limit_bytes=vmem_limit,
        ),
        cost_estimate=pl.CostEstimate(
            flops=int(2 * N * C4 * S),
            transcendentals=0,
            bytes_accessed=int(N * C4 * S * 4 + 2 * N * C4 * 4),
        ),
    )(x_r)

    avg = pooled_avg.reshape(N, C, 4)       # free metadata reshapes of the pooled values
    mx = pooled_max.reshape(N, C, 4)

    # Tiny channel MLP (1x1x1 convs == channel matmuls) + sigmoid as plain XLA:
    # O(N*C*Cr*8) flops on O(N*C*8) data — noise next to the HBM-bound pooling stream.
    w1 = fc1_w.reshape(Cr, C)
    w2 = fc2_w.reshape(C, Cr)

    def mlp(v):                              # v: (N, C, 4)
        h = jnp.einsum("oc,ncd->nod", w1, v)
        h = jnp.maximum(h, 0.0)
        return jnp.einsum("co,nod->ncd", w2, h)

    out = jax.nn.sigmoid(mlp(avg) + mlp(mx))         # (N, C, 4)
    return out.reshape(N, C, 4, 1, 1)


def channel_attention_ref(x, fc1_w, fc2_w):
    """Pure-JAX reference mirroring the PyTorch module."""
    N, C, D, H, W = x.shape
    Cr = fc1_w.shape[0]
    xb = x.reshape(N, C, 4, D // 4, H, W)
    avg = jnp.mean(xb, axis=(3, 4, 5))               # (N, C, 4)
    mx = jnp.max(xb, axis=(3, 4, 5))                 # (N, C, 4)
    w1 = fc1_w.reshape(Cr, C)
    w2 = fc2_w.reshape(C, Cr)

    def mlp(v):
        h = jnp.einsum("oc,ncd->nod", w1, v)
        h = jnp.maximum(h, 0.0)
        return jnp.einsum("co,nod->ncd", w2, h)

    out = jax.nn.sigmoid(mlp(avg) + mlp(mx))
    return out.reshape(N, C, 4, 1, 1)


if __name__ == "__main__":
    def run_case(N, C, D, H, W, ratio, s_tile=None):
        Cr = max(1, C // ratio)
        key = jax.random.PRNGKey(0)
        kx, k1, k2 = jax.random.split(key, 3)
        x = jax.random.normal(kx, (N, C, D, H, W), dtype=jnp.float32)
        fc1_w = jax.random.normal(k1, (Cr, C, 1, 1, 1), dtype=jnp.float32) * 0.1
        fc2_w = jax.random.normal(k2, (C, Cr, 1, 1, 1), dtype=jnp.float32) * 0.1

        out = jax.block_until_ready(channel_attention(x, fc1_w, fc2_w, s_tile=s_tile))
        ref = jax.block_until_ready(channel_attention_ref(x, fc1_w, fc2_w))

        assert out.shape == (N, C, 4, 1, 1), out.shape
        err = float(jnp.max(jnp.abs(out - ref)))
        assert err < 1e-5, err

    # Single full-extent tile, auto-picked (S = 128).
    run_case(2, 32, 8, 8, 8, ratio=8)
    # Multi-tile accumulation path, unmasked steady state (S = 512, forced 128-wide tiles).
    run_case(2, 32, 8, 16, 16, ratio=8, s_tile=128)
    # Remainder path: mask applied on the last tile only (S = 240, tiles of 128).
    run_case(1, 32, 8, 10, 12, ratio=8, s_tile=128)

    print("KERNEL_OK")
</pallas_src>

<mosaic_0001>
module attributes {stable_mosaic.version = 11 : i64} {
  func.func @_pool_kernel(%arg0: i32, %arg1: i32, %arg2: memref<1x128x128xf32, #tpu.memory_space<vmem>>, %arg3: memref<1x1x128xf32, #tpu.memory_space<vmem>>, %arg4: memref<1x1x128xf32, #tpu.memory_space<vmem>>) attributes {dimension_semantics = [#tpu.dimension_semantics<parallel>, #tpu.dimension_semantics<arbitrary>], iteration_bounds = array<i64: 2, 1>, scalar_prefetch = 0 : i64, scratch_operands = 0 : i64, tpu.core_type = #tpu.core_type<tc>, window_params = [{transform_indices = @transform_0, window_bounds = array<i64: 1, 128, 128>}, {transform_indices = @transform_1, window_bounds = array<i64: 1, 1, 128>}, {transform_indices = @transform_2, window_bounds = array<i64: 1, 1, 128>}]} {
    %c0_i32 = arith.constant 0 : i32
    %0 = arith.cmpi eq, %arg1, %c0_i32 : i32
    %1 = arith.extui %0 : i1 to i32
    %c0_i32_0 = arith.constant 0 : i32
    %2 = arith.cmpi ne, %1, %c0_i32_0 : i32
    scf.if %2 {
      %cst_18 = arith.constant 0.000000e+00 : f32
      %22 = vector.broadcast %cst_18 : f32 to vector<1x1x128xf32>
      %c0_19 = arith.constant 0 : index
      %c0_20 = arith.constant 0 : index
      %c0_21 = arith.constant 0 : index
      %23 = vector.load %arg3[%c0_19, %c0_20, %c0_21] : memref<1x1x128xf32, #tpu.memory_space<vmem>>, vector<1x1x128xf32>
      tpu.vector_store %arg3[%c0_19, %c0_20, %c0_21], %22 {strides = array<i32>} : memref<1x1x128xf32, #tpu.memory_space<vmem>>, vector<1x1x128xf32>,
      %cst_22 = arith.constant 0xFF800000 : f32
      %24 = vector.broadcast %cst_22 : f32 to vector<1x1x128xf32>
      %c0_23 = arith.constant 0 : index
      %c0_24 = arith.constant 0 : index
      %c0_25 = arith.constant 0 : index
      %25 = vector.load %arg4[%c0_23, %c0_24, %c0_25] : memref<1x1x128xf32, #tpu.memory_space<vmem>>, vector<1x1x128xf32>
      tpu.vector_store %arg4[%c0_23, %c0_24, %c0_25], %24 {strides = array<i32>} : memref<1x1x128xf32, #tpu.memory_space<vmem>>, vector<1x1x128xf32>,
    } else {
    }
    %c0 = arith.constant 0 : index
    %c0_1 = arith.constant 0 : index
    %c0_2 = arith.constant 0 : index
    %3 = vector.load %arg2[%c0, %c0_1, %c0_2] : memref<1x128x128xf32, #tpu.memory_space<vmem>>, vector<1x128x128xf32>
    %4 = vector.shape_cast %3 : vector<1x128x128xf32> to vector<128x128xf32>
    %c0_3 = arith.constant 0 : index
    %c0_4 = arith.constant 0 : index
    %c0_5 = arith.constant 0 : index
    %5 = vector.load %arg3[%c0_3, %c0_4, %c0_5] : memref<1x1x128xf32, #tpu.memory_space<vmem>>, vector<1x1x128xf32>
    %6 = vector.shape_cast %5 : vector<1x1x128xf32> to vector<128xf32>
    %cst = arith.constant dense<0.000000e+00> : vector<128xf32>
    %7 = vector.multi_reduction <add>, %4, %cst [1] : vector<128x128xf32> to vector<128xf32>
    %8 = arith.addf %6, %7 : vector<128xf32>
    %c0_6 = arith.constant 0 : index
    %c0_7 = arith.constant 0 : index
    %c0_8 = arith.constant 0 : index
    %9 = vector.load %arg3[%c0_6, %c0_7, %c0_8] : memref<1x1x128xf32, #tpu.memory_space<vmem>>, vector<1x1x128xf32>
    %10 = vector.shape_cast %9 : vector<1x1x128xf32> to vector<128xf32>
    %11 = vector.shape_cast %8 : vector<128xf32> to vector<1x1x128xf32>
    tpu.vector_store %arg3[%c0_6, %c0_7, %c0_8], %11 {strides = array<i32>} : memref<1x1x128xf32, #tpu.memory_space<vmem>>, vector<1x1x128xf32>,
    %c0_9 = arith.constant 0 : index
    %c0_10 = arith.constant 0 : index
    %c0_11 = arith.constant 0 : index
    %12 = vector.load %arg4[%c0_9, %c0_10, %c0_11] : memref<1x1x128xf32, #tpu.memory_space<vmem>>, vector<1x1x128xf32>
    %13 = vector.shape_cast %12 : vector<1x1x128xf32> to vector<128xf32>
    %cst_12 = arith.constant dense<0xFF800000> : vector<128xf32>
    %14 = vector.multi_reduction <maximumf>, %4, %cst_12 [1] : vector<128x128xf32> to vector<128xf32>
    %15 = arith.maximumf %13, %14 : vector<128xf32>
    %c0_13 = arith.constant 0 : index
    %c0_14 = arith.constant 0 : index
    %c0_15 = arith.constant 0 : index
    %16 = vector.load %arg4[%c0_13, %c0_14, %c0_15] : memref<1x1x128xf32, #tpu.memory_space<vmem>>, vector<1x1x128xf32>
    %17 = vector.shape_cast %16 : vector<1x1x128xf32> to vector<128xf32>
    %18 = vector.shape_cast %15 : vector<128xf32> to vector<1x1x128xf32>
    tpu.vector_store %arg4[%c0_13, %c0_14, %c0_15], %18 {strides = array<i32>} : memref<1x1x128xf32, #tpu.memory_space<vmem>>, vector<1x1x128xf32>,
    %c0_i32_16 = arith.constant 0 : i32
    %19 = arith.cmpi eq, %arg1, %c0_i32_16 : i32
    %20 = arith.extui %19 : i1 to i32
    %c0_i32_17 = arith.constant 0 : i32
    %21 = arith.cmpi ne, %20, %c0_i32_17 : i32
    scf.if %21 {
      %c0_18 = arith.constant 0 : index
      %c0_19 = arith.constant 0 : index
      %c0_20 = arith.constant 0 : index
      %22 = vector.load %arg3[%c0_18, %c0_19, %c0_20] : memref<1x1x128xf32, #tpu.memory_space<vmem>>, vector<1x1x128xf32>
      %cst_21 = arith.constant 7.812500e-03 : f32
      %23 = vector.broadcast %cst_21 : f32 to vector<1x1x128xf32>
      %24 = arith.mulf %22, %23 : vector<1x1x128xf32>
      %c0_22 = arith.constant 0 : index
      %c0_23 = arith.constant 0 : index
      %c0_24 = arith.constant 0 : index
      %25 = vector.load %arg3[%c0_22, %c0_23, %c0_24] : memref<1x1x128xf32, #tpu.memory_space<vmem>>, vector<1x1x128xf32>
      tpu.vector_store %arg3[%c0_22, %c0_23, %c0_24], %24 {strides = array<i32>} : memref<1x1x128xf32, #tpu.memory_space<vmem>>, vector<1x1x128xf32>,
    } else {
    }
    return
  }
  func.func @transform_0(%arg0: i32, %arg1: i32) -> (i32, i32, i32) {
    %c0_i32 = arith.constant 0 : i32
    %c0_i32_0 = arith.constant 0 : i32
    return %arg0, %c0_i32, %arg1 : i32, i32, i32
  }
  func.func @transform_1(%arg0: i32, %arg1: i32) -> (i32, i32, i32) {
    %c0_i32 = arith.constant 0 : i32
    %c0_i32_0 = arith.constant 0 : i32
    %c0_i32_1 = arith.constant 0 : i32
    return %arg0, %c0_i32, %c0_i32_0 : i32, i32, i32
  }
  func.func @transform_2(%arg0: i32, %arg1: i32) -> (i32, i32, i32) {
    %c0_i32 = arith.constant 0 : i32
    %c0_i32_0 = arith.constant 0 : i32
    %c0_i32_1 = arith.constant 0 : i32
    return %arg0, %c0_i32, %c0_i32_0 : i32, i32, i32
  }
}

</mosaic_0001>

<llo_original>
// kernel: tpu_custom_call.1
$region0: #{tpu_custom_call.1}
  #allocation0 [shape = 'u32[]', space=smem, size = 0x4, offset = 0x4, fixed_abs, tag = 'smem constant byte address 0x4 - core index']
  #allocation1 [shape = 'u32[144,128]{1,0:T(1,128)}', space=vmem, size = 0x12000, scoped, tag = 'internal scratch']
  %s0 = inlined_call_operand.hbm [shape: f32[2,128,128], index: 0, kind: input, shape index: {}]
  %s1 = inlined_call_operand.hbm [shape: f32[2,1,128], index: 1, kind: output, shape index: {0}]
  %s2 = inlined_call_operand.hbm [shape: f32[2,1,128], index: 2, kind: output, shape index: {1}]
  %3 = xla_tuple %s1, %s2
  %s4 = sld [smem:[#allocation0]]
  $region57: #{tpu_custom_call.1} parent=0
    _
  %s6 = ssub.s32 1, %s4
  %s7 = scalar_select 0, %s6, %s4
  $region1: #{tpu_custom_call.1} parent=0
    #allocation2 [shape = 'u8[131072]{0}', space=vmem, size = 0x20000, scoped, tag = 'input window, operand 0']
    #allocation3 [shape = 's32[2]{0}', space=sflag, size = 0x8, scoped, tag = 'scoped memory for tpu_custom_call.1']
    #allocation4 [shape = 's32[2]{0}', space=sflag, size = 0x8, scoped, tag = 'scoped memory for tpu_custom_call.1']
    #allocation5 [shape = 'u8[1024]{0}', space=vmem, size = 0x400, scoped, tag = 'output window, operand 0']
    #allocation6 [shape = 'u8[1024]{0}', space=vmem, size = 0x400, scoped, tag = 'output window, operand 1']
    #allocation7 [shape = 's32[2]{0}', space=sflag, size = 0x8, scoped, tag = 'scoped memory for tpu_custom_call.1']
    %8 = vsyncpa [#allocation3], 0
    %s9 = scalar_lea.sflag [#allocation3], 1
    %10 = vsyncpa %s9, 0
    %11 = vsyncpa [#allocation4], 0
    %s12 = scalar_lea.sflag [#allocation4], 1
    %13 = vsyncpa %s12, 0
    %14 = vsyncpa [#allocation7], 0
    %s15 = scalar_lea.sflag [#allocation7], 1
    %16 = vsyncpa %s15, 0
    loop: start=0, step=1, limit=4
    $region2: #{tpu_custom_call.1} parent=1 // loop_pre_header
      _
    $region3: #{tpu_custom_call.1} parent=1 // loop_header
      %s18 = sphi 0, %s22
      %p19 = scmp.ge.s32.totalorder %s18, 4
      %s25 = sphi 0, %s37
      %s26 = sphi 0, %s33
      %s27 = sphi 0, %s25
      %s28 = sphi 0, %s26
      %s29 = sphi 0, %s27
      %s30 = sphi 0, %s28
      %s42 = sphi 0, %s44
      %s45 = sphi 0, %s42
      %s46 = sphi 0, %s45
      %s62 = sphi 0, %s46
      %s68 = sphi 0, %s70
      %s71 = sphi 0, %s68
      %s72 = sphi 0, %s71
      %s88 = sphi 0, %s72
      %s94 = sphi 0, %s96
      %s97 = sphi 0, %s94
      %s98 = sphi 0, %s97
      %s114 = sphi 0, %s98
    $region4: #{tpu_custom_call.1} parent=1 // loop_header_branch
      %21 = sbr.rel (%p19) target = $region8
    $region5: #{tpu_custom_call.1} parent=1 // loop_body
      %s23 = ssub.s32 %s18, 1
      %s24 = ssub.s32 %s18, 2
      %s31 = sadd.s32 1, %s26
      %p32 = scmp.ge.s32.totalorder %s31, 1
      %s33 = scalar_select %p32, 0, %s31
      %s34 = sadd.s32 1, %s25
      %s35 = scalar_select %p32, %s34, %s25
      %p36 = scmp.ge.s32.totalorder %s35, 2
      %s37 = scalar_select %p36, 0, %s35
      %s38 = ssub.s32 %s25, %s37
      %s39 = ssub.s32 %s26, %s33
      %s40 = sor.u32 %s38, %s39
      %p41 = scmp.eq.s32.totalorder %s40, 0
      %s43 = sadd.s32 %s42, 1
      %s44 = scalar_select %p41, %s42, %s43
      %p47 = pneg %p41
      %p48 = scmp.eq.s32.totalorder %s18, 1
      %p49 = por %p47, %p48
      %p50 = scmp.ne.s32.totalorder %s42, %s45
      %p51 = scmp.eq.s32.totalorder %s18, 0
      %p52 = por %p50, %p51
      %p53 = scmp.ne.s32.totalorder %s42, %s45
      %p54 = scmp.eq.s32.totalorder %s23, 1
      %p55 = por %p53, %p54
      %p56 = scmp.ne.s32.totalorder %s45, %s46
      %p57 = scmp.eq.s32.totalorder %s23, 0
      %p58 = por %p56, %p57
      %p59 = scmp.ne.s32.totalorder %s45, %s46
      %p60 = scmp.eq.s32.totalorder %s24, 1
      %p61 = por %p59, %p60
      %p63 = scmp.ne.s32.totalorder %s46, %s62
      %p64 = scmp.eq.s32.totalorder %s24, 0
      %p65 = por %p63, %p64
      %s66 = ssub.s32 %s25, %s37
      %p67 = scmp.eq.s32.totalorder %s66, 0
      %s69 = sadd.s32 %s68, 1
      %s70 = scalar_select %p67, %s68, %s69
      %p73 = pneg %p67
      %p74 = scmp.eq.s32.totalorder %s18, 1
      %p75 = por %p73, %p74
      %p76 = scmp.ne.s32.totalorder %s68, %s71
      %p77 = scmp.eq.s32.totalorder %s18, 0
      %p78 = por %p76, %p77
      %p79 = scmp.ne.s32.totalorder %s68, %s71
      %p80 = scmp.eq.s32.totalorder %s23, 1
      %p81 = por %p79, %p80
      %p82 = scmp.ne.s32.totalorder %s71, %s72
      %p83 = scmp.eq.s32.totalorder %s23, 0
      %p84 = por %p82, %p83
      %p85 = scmp.ne.s32.totalorder %s71, %s72
      %p86 = scmp.eq.s32.totalorder %s24, 1
      %p87 = por %p85, %p86
      %p89 = scmp.ne.s32.totalorder %s72, %s88
      %p90 = scmp.eq.s32.totalorder %s24, 0
      %p91 = por %p89, %p90
      %s92 = ssub.s32 %s25, %s37
      %p93 = scmp.eq.s32.totalorder %s92, 0
      %s95 = sadd.s32 %s94, 1
      %s96 = scalar_select %p93, %s94, %s95
      %p99 = pneg %p93
      %p100 = scmp.eq.s32.totalorder %s18, 1
      %p101 = por %p99, %p100
      %p102 = scmp.ne.s32.totalorder %s94, %s97
      %p103 = scmp.eq.s32.totalorder %s18, 0
      %p104 = por %p102, %p103
      %p105 = scmp.ne.s32.totalorder %s94, %s97
      %p106 = scmp.eq.s32.totalorder %s23, 1
      %p107 = por %p105, %p106
      %p108 = scmp.ne.s32.totalorder %s97, %s98
      %p109 = scmp.eq.s32.totalorder %s23, 0
      %p110 = por %p108, %p109
      %p111 = scmp.ne.s32.totalorder %s97, %s98
      %p112 = scmp.eq.s32.totalorder %s24, 1
      %p113 = por %p111, %p112
      %p115 = scmp.ne.s32.totalorder %s98, %s114
      %p116 = scmp.eq.s32.totalorder %s24, 0
      %p117 = por %p115, %p116
      %p118 = scmp.le.s32.totalorder 1, %s18
      %p119 = scmp.lt.s32.totalorder %s18, 3
      %p120 = pnand %p118, %p119
      %p121 = pneg %p120
      // Predicated region
      $region9: #{tpu_custom_call.1} parent=5 // pred_check
        _
      $region10: #{tpu_custom_call.1} parent=5 // pred_check_branch
        %123 = sbr.rel (%p120) target = $region12
      $region11: #{tpu_custom_call.1} parent=5 // pred_region
        %s124 = ssub.s32 %s18, 1
      $region12: #{tpu_custom_call.1} parent=5 // pred_fallthru
        _
      %p125 = scmp.lt.s32.totalorder %s18, 2
      // Predicated region
      $region13: #{tpu_custom_call.1} parent=5 // pred_check
        %p126 = pneg %p125
      $region14: #{tpu_custom_call.1} parent=5 // pred_check_branch
        %128 = sbr.rel (%p126) target = $region16
      $region15: #{tpu_custom_call.1} parent=5 // pred_region
        // Predicated region
        $region17: #{tpu_custom_call.1} parent=15 // pred_check
          %p129 = pneg %p52
        $region18: #{tpu_custom_call.1} parent=15 // pred_check_branch
          %131 = sbr.rel (%p129) target = $region20
        $region19: #{tpu_custom_call.1} parent=15 // pred_region
          %s132 = sand.u32 %s42, 1
          %s133 = scalar_lea.sflag [#allocation3], %s132
          %s134 = sand.u32 %s42, 1
          %s135 = smul.addr %s134, 128
          %s136 = scalar_lea.vmem [#allocation2], %s135
          %s138 = ssub.s32 2048, 2048
          %139 = vsyncadd %s133, %s138
          %s140 = smul.addr %s25, 16
          %s141 = sadd.s32 %s26, %s140
          %s142 = smul.addr %s141, 128
          %s143 = scalar_lea.hbm %s0, %s142
          %s144 = sshll.u32 %s136, 4
          %s145 = int_to_ptr.vmem [resolvable:$true] %s144
          %150 = dma.hbm_to_vmem [thread:$0]  %s143, 2048, %s145, %s133, 128, 128, 8
        $region20: #{tpu_custom_call.1} parent=15 // pred_fallthru
          _
      $region16: #{tpu_custom_call.1} parent=5 // pred_fallthru
        _
      %p151 = scmp.le.s32.totalorder 1, %s18
      %p152 = scmp.lt.s32.totalorder %s18, 3
      %p153 = pnand %p151, %p152
      %p154 = pneg %p153
      // Predicated region
      $region21: #{tpu_custom_call.1} parent=5 // pred_check
        _
      $region22: #{tpu_custom_call.1} parent=5 // pred_check_branch
        %156 = sbr.rel (%p153) target = $region24
      $region23: #{tpu_custom_call.1} parent=5 // pred_region
        %s157 = ssub.s32 %s18, 1
        %s158 = sand.u32 %s45, 1
        %s159 = scalar_lea.sflag [#allocation3], %s158
        %s160 = sand.u32 %s45, 1
        %s161 = smul.addr %s160, 128
        %s162 = scalar_lea.vmem [#allocation2], %s161
        // Predicated region
        $region25: #{tpu_custom_call.1} parent=23 // pred_check
          %p163 = pneg %p58
        $region26: #{tpu_custom_call.1} parent=23 // pred_check_branch
          %165 = sbr.rel (%p163) target = $region28
        $region27: #{tpu_custom_call.1} parent=23 // pred_region
          %166 = dma.done %s159, 2048
        $region28: #{tpu_custom_call.1} parent=23 // pred_fallthru
          _
        %s167 = sand.u32 %s45, 1
        %s168 = scalar_lea.sflag [#allocation3], %s167
        %s169 = sand.u32 %s45, 1
        %s170 = smul.addr %s169, 128
        %s171 = scalar_lea.vmem [#allocation2], %s170
        %p172 = pneg %p58
        %p173 = pneg %p55
        %p174 = pneg %p84
        %p175 = pneg %p81
        %s176 = sand.u32 %s71, 1
        %s177 = scalar_lea.sflag [#allocation4], %s176
        %s178 = sand.u32 %s71, 1
        %s179 = scalar_lea.vmem [#allocation5], %s178
        %p180 = pneg %p110
        %p181 = pneg %p107
        %s182 = sand.u32 %s97, 1
        %s183 = scalar_lea.sflag [#allocation7], %s182
        %s184 = sand.u32 %s97, 1
        %s185 = scalar_lea.vmem [#allocation6], %s184
        %p186 = scmp.eq.s32.totalorder %s28, 0
        // Predicated region
        $region29: #{tpu_custom_call.1} parent=23 // pred_check
          %p187 = pneg %p186
        $region30: #{tpu_custom_call.1} parent=23 // pred_check_branch
          %189 = sbr.rel (%p187) target = $region32
        $region31: #{tpu_custom_call.1} parent=23 // pred_region
          %190 = vst [vmem:[%s179] sm:$0x1] 0.0
          %191 = vst [vmem:[%s185] sm:$0x1] -inf
        $region32: #{tpu_custom_call.1} parent=23 // pred_fallthru
          _
        %v192 = vld [vmem:[%s162] sm:$0xff]
        %v193 = vld [vmem:[%s162 + $0x8] sm:$0xff]
        %v194 = vld [vmem:[%s162 + $0x10] sm:$0xff]
        %v195 = vld [vmem:[%s162 + $0x18] sm:$0xff]
        %v196 = vld [vmem:[%s162 + $0x20] sm:$0xff]
        %v197 = vld [vmem:[%s162 + $0x28] sm:$0xff]
        %v198 = vld [vmem:[%s162 + $0x30] sm:$0xff]
        %v199 = vld [vmem:[%s162 + $0x38] sm:$0xff]
        %v200 = vld [vmem:[%s162 + $0x40] sm:$0xff]
        %v201 = vld [vmem:[%s162 + $0x48] sm:$0xff]
        %v202 = vld [vmem:[%s162 + $0x50] sm:$0xff]
        %v203 = vld [vmem:[%s162 + $0x58] sm:$0xff]
        %v204 = vld [vmem:[%s162 + $0x60] sm:$0xff]
        %v205 = vld [vmem:[%s162 + $0x68] sm:$0xff]
        %v206 = vld [vmem:[%s162 + $0x70] sm:$0xff]
        %v207 = vld [vmem:[%s162 + $0x78] sm:$0xff]
        %v208 = vld [vmem:[%s179] sm:$0x1]
        %209 = vadd.xlane.f32.xlu0 %v192
        %v210 = vpop.xlane.xlu0 %209
        %211 = vadd.xlane.f32.xlu0 %v193
        %v212 = vpop.xlane.xlu0 %211
        %213 = vadd.xlane.f32.xlu0 %v194
        %v214 = vpop.xlane.xlu0 %213
        %215 = vadd.xlane.f32.xlu0 %v195
        %v216 = vpop.xlane.xlu0 %215
        %217 = vadd.xlane.f32.xlu0 %v196
        %v218 = vpop.xlane.xlu0 %217
        %219 = vadd.xlane.f32.xlu0 %v197
        %v220 = vpop.xlane.xlu0 %219
        %221 = vadd.xlane.f32.xlu0 %v198
        %v222 = vpop.xlane.xlu0 %221
        %223 = vadd.xlane.f32.xlu0 %v199
        %v224 = vpop.xlane.xlu0 %223
        %225 = vadd.xlane.f32.xlu0 %v200
        %v226 = vpop.xlane.xlu0 %225
        %227 = vadd.xlane.f32.xlu0 %v201
        %v228 = vpop.xlane.xlu0 %227
        %229 = vadd.xlane.f32.xlu0 %v202
        %v230 = vpop.xlane.xlu0 %229
        %231 = vadd.xlane.f32.xlu0 %v203
        %v232 = vpop.xlane.xlu0 %231
        %233 = vadd.xlane.f32.xlu0 %v204
        %v234 = vpop.xlane.xlu0 %233
        %235 = vadd.xlane.f32.xlu0 %v205
        %v236 = vpop.xlane.xlu0 %235
        %237 = vadd.xlane.f32.xlu0 %v206
        %v238 = vpop.xlane.xlu0 %237
        %239 = vadd.xlane.f32.xlu0 %v207
        %v240 = vpop.xlane.xlu0 %239
        %v257 = vlaneseq
        %v258 = vshrl.u32 %v257, 7
        %v259 = vsub.s32 0, %v258
        %v260 = vrot.slane %v210, %v259
        %v261 = vlaneseq
        %v262 = vshrl.u32 %v261, 7
        %v263 = vsub.s32 1, %v262
        %v264 = vrot.slane %v210, %v263
        %v265 = vlaneseq
        %v266 = vshrl.u32 %v265, 7
        %v267 = vsub.s32 2, %v266
        %v268 = vrot.slane %v210, %v267
        %v269 = vlaneseq
        %v270 = vshrl.u32 %v269, 7
        %v271 = vsub.s32 3, %v270
        %v272 = vrot.slane %v210, %v271
        %v273 = vlaneseq
        %v274 = vshrl.u32 %v273, 7
        %v275 = vsub.s32 4, %v274
        %v276 = vrot.slane %v210, %v275
        %v277 = vlaneseq
        %v278 = vshrl.u32 %v277, 7
        %v279 = vsub.s32 5, %v278
        %v280 = vrot.slane %v210, %v279
        %v281 = vlaneseq
        %v282 = vshrl.u32 %v281, 7
        %v283 = vsub.s32 6, %v282
        %v284 = vrot.slane %v210, %v283
        %v285 = vlaneseq
        %v286 = vshrl.u32 %v285, 7
        %v287 = vsub.s32 7, %v286
        %v288 = vrot.slane %v210, %v287
        %v289 = vlaneseq
        %v290 = vshrl.u32 %v289, 7
        %v291 = vsub.s32 0, %v290
        %v292 = vrot.slane %v212, %v291
        %v293 = vlaneseq
        %v294 = vshrl.u32 %v293, 7
        %v295 = vsub.s32 1, %v294
        %v296 = vrot.slane %v212, %v295
        %v297 = vlaneseq
        %v298 = vshrl.u32 %v297, 7
        %v299 = vsub.s32 2, %v298
        %v300 = vrot.slane %v212, %v299
        %v301 = vlaneseq
        %v302 = vshrl.u32 %v301, 7
        %v303 = vsub.s32 3, %v302
        %v304 = vrot.slane %v212, %v303
        %v305 = vlaneseq
        %v306 = vshrl.u32 %v305, 7
        %v307 = vsub.s32 4, %v306
        %v308 = vrot.slane %v212, %v307
        %v309 = vlaneseq
        %v310 = vshrl.u32 %v309, 7
        %v311 = vsub.s32 5, %v310
        %v312 = vrot.slane %v212, %v311
        %v313 = vlaneseq
        %v314 = vshrl.u32 %v313, 7
        %v315 = vsub.s32 6, %v314
        %v316 = vrot.slane %v212, %v315
        %v317 = vlaneseq
        %v318 = vshrl.u32 %v317, 7
        %v319 = vsub.s32 7, %v318
        %v320 = vrot.slane %v212, %v319
        %v321 = vlaneseq
        %v322 = vshrl.u32 %v321, 7
        %v323 = vsub.s32 0, %v322
        %v324 = vrot.slane %v214, %v323
        %v325 = vlaneseq
        %v326 = vshrl.u32 %v325, 7
        %v327 = vsub.s32 1, %v326
        %v328 = vrot.slane %v214, %v327
        %v329 = vlaneseq
        %v330 = vshrl.u32 %v329, 7
        %v331 = vsub.s32 2, %v330
        %v332 = vrot.slane %v214, %v331
        %v333 = vlaneseq
        %v334 = vshrl.u32 %v333, 7
        %v335 = vsub.s32 3, %v334
        %v336 = vrot.slane %v214, %v335
        %v337 = vlaneseq
        %v338 = vshrl.u32 %v337, 7
        %v339 = vsub.s32 4, %v338
        %v340 = vrot.slane %v214, %v339
        %v341 = vlaneseq
        %v342 = vshrl.u32 %v341, 7
        %v343 = vsub.s32 5, %v342
        %v344 = vrot.slane %v214, %v343
        %v345 = vlaneseq
        %v346 = vshrl.u32 %v345, 7
        %v347 = vsub.s32 6, %v346
        %v348 = vrot.slane %v214, %v347
        %v349 = vlaneseq
        %v350 = vshrl.u32 %v349, 7
        %v351 = vsub.s32 7, %v350
        %v352 = vrot.slane %v214, %v351
        %v353 = vlaneseq
        %v354 = vshrl.u32 %v353, 7
        %v355 = vsub.s32 0, %v354
        %v356 = vrot.slane %v216, %v355
        %v357 = vlaneseq
        %v358 = vshrl.u32 %v357, 7
        %v359 = vsub.s32 1, %v358
        %v360 = vrot.slane %v216, %v359
        %v361 = vlaneseq
        %v362 = vshrl.u32 %v361, 7
        %v363 = vsub.s32 2, %v362
        %v364 = vrot.slane %v216, %v363
        %v365 = vlaneseq
        %v366 = vshrl.u32 %v365, 7
        %v367 = vsub.s32 3, %v366
        %v368 = vrot.slane %v216, %v367
        %v369 = vlaneseq
        %v370 = vshrl.u32 %v369, 7
        %v371 = vsub.s32 4, %v370
        %v372 = vrot.slane %v216, %v371
        %v373 = vlaneseq
        %v374 = vshrl.u32 %v373, 7
        %v375 = vsub.s32 5, %v374
        %v376 = vrot.slane %v216, %v375
        %v377 = vlaneseq
        %v378 = vshrl.u32 %v377, 7
        %v379 = vsub.s32 6, %v378
        %v380 = vrot.slane %v216, %v379
        %v381 = vlaneseq
        %v382 = vshrl.u32 %v381, 7
        %v383 = vsub.s32 7, %v382
        %v384 = vrot.slane %v216, %v383
        %v385 = vlaneseq
        %v386 = vshrl.u32 %v385, 7
        %v387 = vsub.s32 0, %v386
        %v388 = vrot.slane %v218, %v387
        %v389 = vlaneseq
        %v390 = vshrl.u32 %v389, 7
        %v391 = vsub.s32 1, %v390
        %v392 = vrot.slane %v218, %v391
        %v393 = vlaneseq
        %v394 = vshrl.u32 %v393, 7
        %v395 = vsub.s32 2, %v394
        %v396 = vrot.slane %v218, %v395
        %v397 = vlaneseq
        %v398 = vshrl.u32 %v397, 7
        %v399 = vsub.s32 3, %v398
        %v400 = vrot.slane %v218, %v399
        %v401 = vlaneseq
        %v402 = vshrl.u32 %v401, 7
        %v403 = vsub.s32 4, %v402
        %v404 = vrot.slane %v218, %v403
        %v405 = vlaneseq
        %v406 = vshrl.u32 %v405, 7
        %v407 = vsub.s32 5, %v406
        %v408 = vrot.slane %v218, %v407
        %v409 = vlaneseq
        %v410 = vshrl.u32 %v409, 7
        %v411 = vsub.s32 6, %v410
        %v412 = vrot.slane %v218, %v411
        %v413 = vlaneseq
        %v414 = vshrl.u32 %v413, 7
        %v415 = vsub.s32 7, %v414
        %v416 = vrot.slane %v218, %v415
        %v417 = vlaneseq
        %v418 = vshrl.u32 %v417, 7
        %v419 = vsub.s32 0, %v418
        %v420 = vrot.slane %v220, %v419
        %v421 = vlaneseq
        %v422 = vshrl.u32 %v421, 7
        %v423 = vsub.s32 1, %v422
        %v424 = vrot.slane %v220, %v423
        %v425 = vlaneseq
        %v426 = vshrl.u32 %v425, 7
        %v427 = vsub.s32 2, %v426
        %v428 = vrot.slane %v220, %v427
        %v429 = vlaneseq
        %v430 = vshrl.u32 %v429, 7
        %v431 = vsub.s32 3, %v430
        %v432 = vrot.slane %v220, %v431
        %v433 = vlaneseq
        %v434 = vshrl.u32 %v433, 7
        %v435 = vsub.s32 4, %v434
        %v436 = vrot.slane %v220, %v435
        %v437 = vlaneseq
        %v438 = vshrl.u32 %v437, 7
        %v439 = vsub.s32 5, %v438
        %v440 = vrot.slane %v220, %v439
        %v441 = vlaneseq
        %v442 = vshrl.u32 %v441, 7
        %v443 = vsub.s32 6, %v442
        %v444 = vrot.slane %v220, %v443
        %v445 = vlaneseq
        %v446 = vshrl.u32 %v445, 7
        %v447 = vsub.s32 7, %v446
        %v448 = vrot.slane %v220, %v447
        %v449 = vlaneseq
        %v450 = vshrl.u32 %v449, 7
        %v451 = vsub.s32 0, %v450
        %v452 = vrot.slane %v222, %v451
        %v453 = vlaneseq
        %v454 = vshrl.u32 %v453, 7
        %v455 = vsub.s32 1, %v454
        %v456 = vrot.slane %v222, %v455
        %v457 = vlaneseq
        %v458 = vshrl.u32 %v457, 7
        %v459 = vsub.s32 2, %v458
        %v460 = vrot.slane %v222, %v459
        %v461 = vlaneseq
        %v462 = vshrl.u32 %v461, 7
        %v463 = vsub.s32 3, %v462
        %v464 = vrot.slane %v222, %v463
        %v465 = vlaneseq
        %v466 = vshrl.u32 %v465, 7
        %v467 = vsub.s32 4, %v466
        %v468 = vrot.slane %v222, %v467
        %v469 = vlaneseq
        %v470 = vshrl.u32 %v469, 7
        %v471 = vsub.s32 5, %v470
        %v472 = vrot.slane %v222, %v471
        %v473 = vlaneseq
        %v474 = vshrl.u32 %v473, 7
        %v475 = vsub.s32 6, %v474
        %v476 = vrot.slane %v222, %v475
        %v477 = vlaneseq
        %v478 = vshrl.u32 %v477, 7
        %v479 = vsub.s32 7, %v478
        %v480 = vrot.slane %v222, %v479
        %v481 = vlaneseq
        %v482 = vshrl.u32 %v481, 7
        %v483 = vsub.s32 0, %v482
        %v484 = vrot.slane %v224, %v483
        %v485 = vlaneseq
        %v486 = vshrl.u32 %v485, 7
        %v487 = vsub.s32 1, %v486
        %v488 = vrot.slane %v224, %v487
        %v489 = vlaneseq
        %v490 = vshrl.u32 %v489, 7
        %v491 = vsub.s32 2, %v490
        %v492 = vrot.slane %v224, %v491
        %v493 = vlaneseq
        %v494 = vshrl.u32 %v493, 7
        %v495 = vsub.s32 3, %v494
        %v496 = vrot.slane %v224, %v495
        %v497 = vlaneseq
        %v498 = vshrl.u32 %v497, 7
        %v499 = vsub.s32 4, %v498
        %v500 = vrot.slane %v224, %v499
        %v501 = vlaneseq
        %v502 = vshrl.u32 %v501, 7
        %v503 = vsub.s32 5, %v502
        %v504 = vrot.slane %v224, %v503
        %v505 = vlaneseq
        %v506 = vshrl.u32 %v505, 7
        %v507 = vsub.s32 6, %v506
        %v508 = vrot.slane %v224, %v507
        %v509 = vlaneseq
        %v510 = vshrl.u32 %v509, 7
        %v511 = vsub.s32 7, %v510
        %v512 = vrot.slane %v224, %v511
        %v513 = vlaneseq
        %v514 = vshrl.u32 %v513, 7
        %v515 = vsub.s32 0, %v514
        %v516 = vrot.slane %v226, %v515
        %v517 = vlaneseq
        %v518 = vshrl.u32 %v517, 7
        %v519 = vsub.s32 1, %v518
        %v520 = vrot.slane %v226, %v519
        %v521 = vlaneseq
        %v522 = vshrl.u32 %v521, 7
        %v523 = vsub.s32 2, %v522
        %v524 = vrot.slane %v226, %v523
        %v525 = vlaneseq
        %v526 = vshrl.u32 %v525, 7
        %v527 = vsub.s32 3, %v526
        %v528 = vrot.slane %v226, %v527
        %v529 = vlaneseq
        %v530 = vshrl.u32 %v529, 7
        %v531 = vsub.s32 4, %v530
        %v532 = vrot.slane %v226, %v531
        %v533 = vlaneseq
        %v534 = vshrl.u32 %v533, 7
        %v535 = vsub.s32 5, %v534
        %v536 = vrot.slane %v226, %v535
        %v537 = vlaneseq
        %v538 = vshrl.u32 %v537, 7
        %v539 = vsub.s32 6, %v538
        %v540 = vrot.slane %v226, %v539
        %v541 = vlaneseq
        %v542 = vshrl.u32 %v541, 7
        %v543 = vsub.s32 7, %v542
        %v544 = vrot.slane %v226, %v543
        %v545 = vlaneseq
        %v546 = vshrl.u32 %v545, 7
        %v547 = vsub.s32 0, %v546
        %v548 = vrot.slane %v228, %v547
        %v549 = vlaneseq
        %v550 = vshrl.u32 %v549, 7
        %v551 = vsub.s32 1, %v550
        %v552 = vrot.slane %v228, %v551
        %v553 = vlaneseq
        %v554 = vshrl.u32 %v553, 7
        %v555 = vsub.s32 2, %v554
        %v556 = vrot.slane %v228, %v555
        %v557 = vlaneseq
        %v558 = vshrl.u32 %v557, 7
        %v559 = vsub.s32 3, %v558
        %v560 = vrot.slane %v228, %v559
        %v561 = vlaneseq
        %v562 = vshrl.u32 %v561, 7
        %v563 = vsub.s32 4, %v562
        %v564 = vrot.slane %v228, %v563
        %v565 = vlaneseq
        %v566 = vshrl.u32 %v565, 7
        %v567 = vsub.s32 5, %v566
        %v568 = vrot.slane %v228, %v567
        %v569 = vlaneseq
        %v570 = vshrl.u32 %v569, 7
        %v571 = vsub.s32 6, %v570
        %v572 = vrot.slane %v228, %v571
        %v573 = vlaneseq
        %v574 = vshrl.u32 %v573, 7
        %v575 = vsub.s32 7, %v574
        %v576 = vrot.slane %v228, %v575
        %v577 = vlaneseq
        %v578 = vshrl.u32 %v577, 7
        %v579 = vsub.s32 0, %v578
        %v580 = vrot.slane %v230, %v579
        %v581 = vlaneseq
        %v582 = vshrl.u32 %v581, 7
        %v583 = vsub.s32 1, %v582
        %v584 = vrot.slane %v230, %v583
        %v585 = vlaneseq
        %v586 = vshrl.u32 %v585, 7
        %v587 = vsub.s32 2, %v586
        %v588 = vrot.slane %v230, %v587
        %v589 = vlaneseq
        %v590 = vshrl.u32 %v589, 7
        %v591 = vsub.s32 3, %v590
        %v592 = vrot.slane %v230, %v591
        %v593 = vlaneseq
        %v594 = vshrl.u32 %v593, 7
        %v595 = vsub.s32 4, %v594
        %v596 = vrot.slane %v230, %v595
        %v597 = vlaneseq
        %v598 = vshrl.u32 %v597, 7
        %v599 = vsub.s32 5, %v598
        %v600 = vrot.slane %v230, %v599
        %v601 = vlaneseq
        %v602 = vshrl.u32 %v601, 7
        %v603 = vsub.s32 6, %v602
        %v604 = vrot.slane %v230, %v603
        %v605 = vlaneseq
        %v606 = vshrl.u32 %v605, 7
        %v607 = vsub.s32 7, %v606
        %v608 = vrot.slane %v230, %v607
        %v609 = vlaneseq
        %v610 = vshrl.u32 %v609, 7
        %v611 = vsub.s32 0, %v610
        %v612 = vrot.slane %v232, %v611
        %v613 = vlaneseq
        %v614 = vshrl.u32 %v613, 7
        %v615 = vsub.s32 1, %v614
        %v616 = vrot.slane %v232, %v615
        %v617 = vlaneseq
        %v618 = vshrl.u32 %v617, 7
        %v619 = vsub.s32 2, %v618
        %v620 = vrot.slane %v232, %v619
        %v621 = vlaneseq
        %v622 = vshrl.u32 %v621, 7
        %v623 = vsub.s32 3, %v622
        %v624 = vrot.slane %v232, %v623
        %v625 = vlaneseq
        %v626 = vshrl.u32 %v625, 7
        %v627 = vsub.s32 4, %v626
        %v628 = vrot.slane %v232, %v627
        %v629 = vlaneseq
        %v630 = vshrl.u32 %v629, 7
        %v631 = vsub.s32 5, %v630
        %v632 = vrot.slane %v232, %v631
        %v633 = vlaneseq
        %v634 = vshrl.u32 %v633, 7
        %v635 = vsub.s32 6, %v634
        %v636 = vrot.slane %v232, %v635
        %v637 = vlaneseq
        %v638 = vshrl.u32 %v637, 7
        %v639 = vsub.s32 7, %v638
        %v640 = vrot.slane %v232, %v639
        %v641 = vlaneseq
        %v642 = vshrl.u32 %v641, 7
        %v643 = vsub.s32 0, %v642
        %v644 = vrot.slane %v234, %v643
        %v645 = vlaneseq
        %v646 = vshrl.u32 %v645, 7
        %v647 = vsub.s32 1, %v646
        %v648 = vrot.slane %v234, %v647
        %v649 = vlaneseq
        %v650 = vshrl.u32 %v649, 7
        %v651 = vsub.s32 2, %v650
        %v652 = vrot.slane %v234, %v651
        %v653 = vlaneseq
        %v654 = vshrl.u32 %v653, 7
        %v655 = vsub.s32 3, %v654
        %v656 = vrot.slane %v234, %v655
        %v657 = vlaneseq
        %v658 = vshrl.u32 %v657, 7
        %v659 = vsub.s32 4, %v658
        %v660 = vrot.slane %v234, %v659
        %v661 = vlaneseq
        %v662 = vshrl.u32 %v661, 7
        %v663 = vsub.s32 5, %v662
        %v664 = vrot.slane %v234, %v663
        %v665 = vlaneseq
        %v666 = vshrl.u32 %v665, 7
        %v667 = vsub.s32 6, %v666
        %v668 = vrot.slane %v234, %v667
        %v669 = vlaneseq
        %v670 = vshrl.u32 %v669, 7
        %v671 = vsub.s32 7, %v670
        %v672 = vrot.slane %v234, %v671
        %v673 = vlaneseq
        %v674 = vshrl.u32 %v673, 7
        %v675 = vsub.s32 0, %v674
        %v676 = vrot.slane %v236, %v675
        %v677 = vlaneseq
        %v678 = vshrl.u32 %v677, 7
        %v679 = vsub.s32 1, %v678
        %v680 = vrot.slane %v236, %v679
        %v681 = vlaneseq
        %v682 = vshrl.u32 %v681, 7
        %v683 = vsub.s32 2, %v682
        %v684 = vrot.slane %v236, %v683
        %v685 = vlaneseq
        %v686 = vshrl.u32 %v685, 7
        %v687 = vsub.s32 3, %v686
        %v688 = vrot.slane %v236, %v687
        %v689 = vlaneseq
        %v690 = vshrl.u32 %v689, 7
        %v691 = vsub.s32 4, %v690
        %v692 = vrot.slane %v236, %v691
        %v693 = vlaneseq
        %v694 = vshrl.u32 %v693, 7
        %v695 = vsub.s32 5, %v694
        %v696 = vrot.slane %v236, %v695
        %v697 = vlaneseq
        %v698 = vshrl.u32 %v697, 7
        %v699 = vsub.s32 6, %v698
        %v700 = vrot.slane %v236, %v699
        %v701 = vlaneseq
        %v702 = vshrl.u32 %v701, 7
        %v703 = vsub.s32 7, %v702
        %v704 = vrot.slane %v236, %v703
        %v705 = vlaneseq
        %v706 = vshrl.u32 %v705, 7
        %v707 = vsub.s32 0, %v706
        %v708 = vrot.slane %v238, %v707
        %v709 = vlaneseq
        %v710 = vshrl.u32 %v709, 7
        %v711 = vsub.s32 1, %v710
        %v712 = vrot.slane %v238, %v711
        %v713 = vlaneseq
        %v714 = vshrl.u32 %v713, 7
        %v715 = vsub.s32 2, %v714
        %v716 = vrot.slane %v238, %v715
        %v717 = vlaneseq
        %v718 = vshrl.u32 %v717, 7
        %v719 = vsub.s32 3, %v718
        %v720 = vrot.slane %v238, %v719
        %v721 = vlaneseq
        %v722 = vshrl.u32 %v721, 7
        %v723 = vsub.s32 4, %v722
        %v724 = vrot.slane %v238, %v723
        %v725 = vlaneseq
        %v726 = vshrl.u32 %v725, 7
        %v727 = vsub.s32 5, %v726
        %v728 = vrot.slane %v238, %v727
        %v729 = vlaneseq
        %v730 = vshrl.u32 %v729, 7
        %v731 = vsub.s32 6, %v730
        %v732 = vrot.slane %v238, %v731
        %v733 = vlaneseq
        %v734 = vshrl.u32 %v733, 7
        %v735 = vsub.s32 7, %v734
        %v736 = vrot.slane %v238, %v735
        %v737 = vlaneseq
        %v738 = vshrl.u32 %v737, 7
        %v739 = vsub.s32 0, %v738
        %v740 = vrot.slane %v240, %v739
        %v741 = vlaneseq
        %v742 = vshrl.u32 %v741, 7
        %v743 = vsub.s32 1, %v742
        %v744 = vrot.slane %v240, %v743
        %v745 = vlaneseq
        %v746 = vshrl.u32 %v745, 7
        %v747 = vsub.s32 2, %v746
        %v748 = vrot.slane %v240, %v747
        %v749 = vlaneseq
        %v750 = vshrl.u32 %v749, 7
        %v751 = vsub.s32 3, %v750
        %v752 = vrot.slane %v240, %v751
        %v753 = vlaneseq
        %v754 = vshrl.u32 %v753, 7
        %v755 = vsub.s32 4, %v754
        %v756 = vrot.slane %v240, %v755
        %v757 = vlaneseq
        %v758 = vshrl.u32 %v757, 7
        %v759 = vsub.s32 5, %v758
        %v760 = vrot.slane %v240, %v759
        %v761 = vlaneseq
        %v762 = vshrl.u32 %v761, 7
        %v763 = vsub.s32 6, %v762
        %v764 = vrot.slane %v240, %v763
        %v765 = vlaneseq
        %v766 = vshrl.u32 %v765, 7
        %v767 = vsub.s32 7, %v766
        %v768 = vrot.slane %v240, %v767
        %v769 = vcombine.low %v260, %v264
        %v770 = vcombine.low %v268, %v272
        %v771 = vcombine.low %v276, %v280
        %v772 = vcombine.low %v284, %v288
        %v774 = vunpack.c.l.s4 1966171168
        %v775 = vunpack.c.0.s8 %v774
        %v776 = vlaneseq
        %v777 = vshrl.u32 %v776, 7
        %v778 = vsub.s32 %v775, %v777
        %v779 = vrot.slane %v769, %v778
        %v781 = vunpack.c.l.s4 1966171168
        %v782 = vunpack.c.0.s8 %v781
        %v783 = vlaneseq
        %v784 = vshrl.u32 %v783, 7
        %v785 = vsub.s32 %v782, %v784
        %v786 = vrot.slane %v770, %v785
        %v788 = vunpack.c.l.s4 1966171168
        %v789 = vunpack.c.0.s8 %v788
        %v790 = vlaneseq
        %v791 = vshrl.u32 %v790, 7
        %v792 = vsub.s32 %v789, %v791
        %v793 = vrot.slane %v771, %v792
        %v795 = vunpack.c.l.s4 1966171168
        %v796 = vunpack.c.0.s8 %v795
        %v797 = vlaneseq
        %v798 = vshrl.u32 %v797, 7
        %v799 = vsub.s32 %v796, %v798
        %v800 = vrot.slane %v772, %v799
        %v801 = vcombine.low %v779, %v786
        %v802 = vcombine.low %v793, %v800
        %v804 = vunpack.c.l.s4 1966171168
        %v805 = vunpack.c.0.s8 %v804
        %v806 = vlaneseq
        %v807 = vshrl.u32 %v806, 7
        %v808 = vsub.s32 %v805, %v807
        %v809 = vrot.slane %v801, %v808
        %v811 = vunpack.c.l.s4 1966171168
        %v812 = vunpack.c.0.s8 %v811
        %v813 = vlaneseq
        %v814 = vshrl.u32 %v813, 7
        %v815 = vsub.s32 %v812, %v814
        %v816 = vrot.slane %v802, %v815
        %v817 = vcombine.low %v809, %v816
        %v818 = vcombine.low %v292, %v296
        %v819 = vcombine.low %v300, %v304
        %v820 = vcombine.low %v308, %v312
        %v821 = vcombine.low %v316, %v320
        %v823 = vunpack.c.l.s4 1966171168
        %v824 = vunpack.c.0.s8 %v823
        %v825 = vlaneseq
        %v826 = vshrl.u32 %v825, 7
        %v827 = vsub.s32 %v824, %v826
        %v828 = vrot.slane %v818, %v827
        %v830 = vunpack.c.l.s4 1966171168
        %v831 = vunpack.c.0.s8 %v830
        %v832 = vlaneseq
        %v833 = vshrl.u32 %v832, 7
        %v834 = vsub.s32 %v831, %v833
        %v835 = vrot.slane %v819, %v834
        %v837 = vunpack.c.l.s4 1966171168
        %v838 = vunpack.c.0.s8 %v837
        %v839 = vlaneseq
        %v840 = vshrl.u32 %v839, 7
        %v841 = vsub.s32 %v838, %v840
        %v842 = vrot.slane %v820, %v841
        %v844 = vunpack.c.l.s4 1966171168
        %v845 = vunpack.c.0.s8 %v844
        %v846 = vlaneseq
        %v847 = vshrl.u32 %v846, 7
        %v848 = vsub.s32 %v845, %v847
        %v849 = vrot.slane %v821, %v848
        %v850 = vcombine.low %v828, %v835
        %v851 = vcombine.low %v842, %v849
        %v853 = vunpack.c.l.s4 1966171168
        %v854 = vunpack.c.0.s8 %v853
        %v855 = vlaneseq
        %v856 = vshrl.u32 %v855, 7
        %v857 = vsub.s32 %v854, %v856
        %v858 = vrot.slane %v850, %v857
        %v860 = vunpack.c.l.s4 1966171168
        %v861 = vunpack.c.0.s8 %v860
        %v862 = vlaneseq
        %v863 = vshrl.u32 %v862, 7
        %v864 = vsub.s32 %v861, %v863
        %v865 = vrot.slane %v851, %v864
        %v866 = vcombine.low %v858, %v865
        %v867 = vcombine.low %v324, %v328
        %v868 = vcombine.low %v332, %v336
        %v869 = vcombine.low %v340, %v344
        %v870 = vcombine.low %v348, %v352
        %v872 = vunpack.c.l.s4 1966171168
        %v873 = vunpack.c.0.s8 %v872
        %v874 = vlaneseq
        %v875 = vshrl.u32 %v874, 7
        %v876 = vsub.s32 %v873, %v875
        %v877 = vrot.slane %v867, %v876
        %v879 = vunpack.c.l.s4 1966171168
        %v880 = vunpack.c.0.s8 %v879
        %v881 = vlaneseq
        %v882 = vshrl.u32 %v881, 7
        %v883 = vsub.s32 %v880, %v882
        %v884 = vrot.slane %v868, %v883
        %v886 = vunpack.c.l.s4 1966171168
        %v887 = vunpack.c.0.s8 %v886
        %v888 = vlaneseq
        %v889 = vshrl.u32 %v888, 7
        %v890 = vsub.s32 %v887, %v889
        %v891 = vrot.slane %v869, %v890
        %v893 = vunpack.c.l.s4 1966171168
        %v894 = vunpack.c.0.s8 %v893
        %v895 = vlaneseq
        %v896 = vshrl.u32 %v895, 7
        %v897 = vsub.s32 %v894, %v896
        %v898 = vrot.slane %v870, %v897
        %v899 = vcombine.low %v877, %v884
        %v900 = vcombine.low %v891, %v898
        %v902 = vunpack.c.l.s4 1966171168
        %v903 = vunpack.c.0.s8 %v902
        %v904 = vlaneseq
        %v905 = vshrl.u32 %v904, 7
        %v906 = vsub.s32 %v903, %v905
        %v907 = vrot.slane %v899, %v906
        %v909 = vunpack.c.l.s4 1966171168
        %v910 = vunpack.c.0.s8 %v909
        %v911 = vlaneseq
        %v912 = vshrl.u32 %v911, 7
        %v913 = vsub.s32 %v910, %v912
        %v914 = vrot.slane %v900, %v913
        %v915 = vcombine.low %v907, %v914
        %v916 = vcombine.low %v356, %v360
        %v917 = vcombine.low %v364, %v368
        %v918 = vcombine.low %v372, %v376
        %v919 = vcombine.low %v380, %v384
        %v921 = vunpack.c.l.s4 1966171168
        %v922 = vunpack.c.0.s8 %v921
        %v923 = vlaneseq
        %v924 = vshrl.u32 %v923, 7
        %v925 = vsub.s32 %v922, %v924
        %v926 = vrot.slane %v916, %v925
        %v928 = vunpack.c.l.s4 1966171168
        %v929 = vunpack.c.0.s8 %v928
        %v930 = vlaneseq
        %v931 = vshrl.u32 %v930, 7
        %v932 = vsub.s32 %v929, %v931
        %v933 = vrot.slane %v917, %v932
        %v935 = vunpack.c.l.s4 1966171168
        %v936 = vunpack.c.0.s8 %v935
        %v937 = vlaneseq
        %v938 = vshrl.u32 %v937, 7
        %v939 = vsub.s32 %v936, %v938
        %v940 = vrot.slane %v918, %v939
        %v942 = vunpack.c.l.s4 1966171168
        %v943 = vunpack.c.0.s8 %v942
        %v944 = vlaneseq
        %v945 = vshrl.u32 %v944, 7
        %v946 = vsub.s32 %v943, %v945
        %v947 = vrot.slane %v919, %v946
        %v948 = vcombine.low %v926, %v933
        %v949 = vcombine.low %v940, %v947
        %v951 = vunpack.c.l.s4 1966171168
        %v952 = vunpack.c.0.s8 %v951
        %v953 = vlaneseq
        %v954 = vshrl.u32 %v953, 7
        %v955 = vsub.s32 %v952, %v954
        %v956 = vrot.slane %v948, %v955
        %v958 = vunpack.c.l.s4 1966171168
        %v959 = vunpack.c.0.s8 %v958
        %v960 = vlaneseq
        %v961 = vshrl.u32 %v960, 7
        %v962 = vsub.s32 %v959, %v961
        %v963 = vrot.slane %v949, %v962
        %v964 = vcombine.low %v956, %v963
        %v965 = vcombine.low %v388, %v392
        %v966 = vcombine.low %v396, %v400
        %v967 = vcombine.low %v404, %v408
        %v968 = vcombine.low %v412, %v416
        %v970 = vunpack.c.l.s4 1966171168
        %v971 = vunpack.c.0.s8 %v970
        %v972 = vlaneseq
        %v973 = vshrl.u32 %v972, 7
        %v974 = vsub.s32 %v971, %v973
        %v975 = vrot.slane %v965, %v974
        %v977 = vunpack.c.l.s4 1966171168
        %v978 = vunpack.c.0.s8 %v977
        %v979 = vlaneseq
        %v980 = vshrl.u32 %v979, 7
        %v981 = vsub.s32 %v978, %v980
        %v982 = vrot.slane %v966, %v981
        %v984 = vunpack.c.l.s4 1966171168
        %v985 = vunpack.c.0.s8 %v984
        %v986 = vlaneseq
        %v987 = vshrl.u32 %v986, 7
        %v988 = vsub.s32 %v985, %v987
        %v989 = vrot.slane %v967, %v988
        %v991 = vunpack.c.l.s4 1966171168
        %v992 = vunpack.c.0.s8 %v991
        %v993 = vlaneseq
        %v994 = vshrl.u32 %v993, 7
        %v995 = vsub.s32 %v992, %v994
        %v996 = vrot.slane %v968, %v995
        %v997 = vcombine.low %v975, %v982
        %v998 = vcombine.low %v989, %v996
        %v1000 = vunpack.c.l.s4 1966171168
        %v1001 = vunpack.c.0.s8 %v1000
        %v1002 = vlaneseq
        %v1003 = vshrl.u32 %v1002, 7
        %v1004 = vsub.s32 %v1001, %v1003
        %v1005 = vrot.slane %v997, %v1004
        %v1007 = vunpack.c.l.s4 1966171168
        %v1008 = vunpack.c.0.s8 %v1007
        %v1009 = vlaneseq
        %v1010 = vshrl.u32 %v1009, 7
        %v1011 = vsub.s32 %v1008, %v1010
        %v1012 = vrot.slane %v998, %v1011
        %v1013 = vcombine.low %v1005, %v1012
        %v1014 = vcombine.low %v420, %v424
        %v1015 = vcombine.low %v428, %v432
        %v1016 = vcombine.low %v436, %v440
        %v1017 = vcombine.low %v444, %v448
        %v1019 = vunpack.c.l.s4 1966171168
        %v1020 = vunpack.c.0.s8 %v1019
        %v1021 = vlaneseq
        %v1022 = vshrl.u32 %v1021, 7
        %v1023 = vsub.s32 %v1020, %v1022
        %v1024 = vrot.slane %v1014, %v1023
        %v1026 = vunpack.c.l.s4 1966171168
        %v1027 = vunpack.c.0.s8 %v1026
        %v1028 = vlaneseq
        %v1029 = vshrl.u32 %v1028, 7
        %v1030 = vsub.s32 %v1027, %v1029
        %v1031 = vrot.slane %v1015, %v1030
        %v1033 = vunpack.c.l.s4 1966171168
        %v1034 = vunpack.c.0.s8 %v1033
        %v1035 = vlaneseq
        %v1036 = vshrl.u32 %v1035, 7
        %v1037 = vsub.s32 %v1034, %v1036
        %v1038 = vrot.slane %v1016, %v1037
        %v1040 = vunpack.c.l.s4 1966171168
        %v1041 = vunpack.c.0.s8 %v1040
        %v1042 = vlaneseq
        %v1043 = vshrl.u32 %v1042, 7
        %v1044 = vsub.s32 %v1041, %v1043
        %v1045 = vrot.slane %v1017, %v1044
        %v1046 = vcombine.low %v1024, %v1031
        %v1047 = vcombine.low %v1038, %v1045
        %v1049 = vunpack.c.l.s4 1966171168
        %v1050 = vunpack.c.0.s8 %v1049
        %v1051 = vlaneseq
        %v1052 = vshrl.u32 %v1051, 7
        %v1053 = vsub.s32 %v1050, %v1052
        %v1054 = vrot.slane %v1046, %v1053
        %v1056 = vunpack.c.l.s4 1966171168
        %v1057 = vunpack.c.0.s8 %v1056
        %v1058 = vlaneseq
        %v1059 = vshrl.u32 %v1058, 7
        %v1060 = vsub.s32 %v1057, %v1059
        %v1061 = vrot.slane %v1047, %v1060
        %v1062 = vcombine.low %v1054, %v1061
        %v1063 = vcombine.low %v452, %v456
        %v1064 = vcombine.low %v460, %v464
        %v1065 = vcombine.low %v468, %v472
        %v1066 = vcombine.low %v476, %v480
        %v1068 = vunpack.c.l.s4 1966171168
        %v1069 = vunpack.c.0.s8 %v1068
        %v1070 = vlaneseq
        %v1071 = vshrl.u32 %v1070, 7
        %v1072 = vsub.s32 %v1069, %v1071
        %v1073 = vrot.slane %v1063, %v1072
        %v1075 = vunpack.c.l.s4 1966171168
        %v1076 = vunpack.c.0.s8 %v1075
        %v1077 = vlaneseq
        %v1078 = vshrl.u32 %v1077, 7
        %v1079 = vsub.s32 %v1076, %v1078
        %v1080 = vrot.slane %v1064, %v1079
        %v1082 = vunpack.c.l.s4 1966171168
        %v1083 = vunpack.c.0.s8 %v1082
        %v1084 = vlaneseq
        %v1085 = vshrl.u32 %v1084, 7
        %v1086 = vsub.s32 %v1083, %v1085
        %v1087 = vrot.slane %v1065, %v1086
        %v1089 = vunpack.c.l.s4 1966171168
        %v1090 = vunpack.c.0.s8 %v1089
        %v1091 = vlaneseq
        %v1092 = vshrl.u32 %v1091, 7
        %v1093 = vsub.s32 %v1090, %v1092
        %v1094 = vrot.slane %v1066, %v1093
        %v1095 = vcombine.low %v1073, %v1080
        %v1096 = vcombine.low %v1087, %v1094
        %v1098 = vunpack.c.l.s4 1966171168
        %v1099 = vunpack.c.0.s8 %v1098
        %v1100 = vlaneseq
        %v1101 = vshrl.u32 %v1100, 7
        %v1102 = vsub.s32 %v1099, %v1101
        %v1103 = vrot.slane %v1095, %v1102
        %v1105 = vunpack.c.l.s4 1966171168
        %v1106 = vunpack.c.0.s8 %v1105
        %v1107 = vlaneseq
        %v1108 = vshrl.u32 %v1107, 7
        %v1109 = vsub.s32 %v1106, %v1108
        %v1110 = vrot.slane %v1096, %v1109
        %v1111 = vcombine.low %v1103, %v1110
        %v1112 = vcombine.low %v484, %v488
        %v1113 = vcombine.low %v492, %v496
        %v1114 = vcombine.low %v500, %v504
        %v1115 = vcombine.low %v508, %v512
        %v1117 = vunpack.c.l.s4 1966171168
        %v1118 = vunpack.c.0.s8 %v1117
        %v1119 = vlaneseq
        %v1120 = vshrl.u32 %v1119, 7
        %v1121 = vsub.s32 %v1118, %v1120
        %v1122 = vrot.slane %v1112, %v1121
        %v1124 = vunpack.c.l.s4 1966171168
        %v1125 = vunpack.c.0.s8 %v1124
        %v1126 = vlaneseq
        %v1127 = vshrl.u32 %v1126, 7
        %v1128 = vsub.s32 %v1125, %v1127
        %v1129 = vrot.slane %v1113, %v1128
        %v1131 = vunpack.c.l.s4 1966171168
        %v1132 = vunpack.c.0.s8 %v1131
        %v1133 = vlaneseq
        %v1134 = vshrl.u32 %v1133, 7
        %v1135 = vsub.s32 %v1132, %v1134
        %v1136 = vrot.slane %v1114, %v1135
        %v1138 = vunpack.c.l.s4 1966171168
        %v1139 = vunpack.c.0.s8 %v1138
        %v1140 = vlaneseq
        %v1141 = vshrl.u32 %v1140, 7
        %v1142 = vsub.s32 %v1139, %v1141
        %v1143 = vrot.slane %v1115, %v1142
        %v1144 = vcombine.low %v1122, %v1129
        %v1145 = vcombine.low %v1136, %v1143
        %v1147 = vunpack.c.l.s4 1966171168
        %v1148 = vunpack.c.0.s8 %v1147
        %v1149 = vlaneseq
        %v1150 = vshrl.u32 %v1149, 7
        %v1151 = vsub.s32 %v1148, %v1150
        %v1152 = vrot.slane %v1144, %v1151
        %v1154 = vunpack.c.l.s4 1966171168
        %v1155 = vunpack.c.0.s8 %v1154
        %v1156 = vlaneseq
        %v1157 = vshrl.u32 %v1156, 7
        %v1158 = vsub.s32 %v1155, %v1157
        %v1159 = vrot.slane %v1145, %v1158
        %v1160 = vcombine.low %v1152, %v1159
        %v1161 = vcombine.low %v516, %v520
        %v1162 = vcombine.low %v524, %v528
        %v1163 = vcombine.low %v532, %v536
        %v1164 = vcombine.low %v540, %v544
        %v1166 = vunpack.c.l.s4 1966171168
        %v1167 = vunpack.c.0.s8 %v1166
        %v1168 = vlaneseq
        %v1169 = vshrl.u32 %v1168, 7
        %v1170 = vsub.s32 %v1167, %v1169
        %v1171 = vrot.slane %v1161, %v1170
        %v1173 = vunpack.c.l.s4 1966171168
        %v1174 = vunpack.c.0.s8 %v1173
        %v1175 = vlaneseq
        %v1176 = vshrl.u32 %v1175, 7
        %v1177 = vsub.s32 %v1174, %v1176
        %v1178 = vrot.slane %v1162, %v1177
        %v1180 = vunpack.c.l.s4 1966171168
        %v1181 = vunpack.c.0.s8 %v1180
        %v1182 = vlaneseq
        %v1183 = vshrl.u32 %v1182, 7
        %v1184 = vsub.s32 %v1181, %v1183
        %v1185 = vrot.slane %v1163, %v1184
        %v1187 = vunpack.c.l.s4 1966171168
        %v1188 = vunpack.c.0.s8 %v1187
        %v1189 = vlaneseq
        %v1190 = vshrl.u32 %v1189, 7
        %v1191 = vsub.s32 %v1188, %v1190
        %v1192 = vrot.slane %v1164, %v1191
        %v1193 = vcombine.low %v1171, %v1178
        %v1194 = vcombine.low %v1185, %v1192
        %v1196 = vunpack.c.l.s4 1966171168
        %v1197 = vunpack.c.0.s8 %v1196
        %v1198 = vlaneseq
        %v1199 = vshrl.u32 %v1198, 7
        %v1200 = vsub.s32 %v1197, %v1199
        %v1201 = vrot.slane %v1193, %v1200
        %v1203 = vunpack.c.l.s4 1966171168
        %v1204 = vunpack.c.0.s8 %v1203
        %v1205 = vlaneseq
        %v1206 = vshrl.u32 %v1205, 7
        %v1207 = vsub.s32 %v1204, %v1206
        %v1208 = vrot.slane %v1194, %v1207
        %v1209 = vcombine.low %v1201, %v1208
        %v1210 = vcombine.low %v548, %v552
        %v1211 = vcombine.low %v556, %v560
        %v1212 = vcombine.low %v564, %v568
        %v1213 = vcombine.low %v572, %v576
        %v1215 = vunpack.c.l.s4 1966171168
        %v1216 = vunpack.c.0.s8 %v1215
        %v1217 = vlaneseq
        %v1218 = vshrl.u32 %v1217, 7
        %v1219 = vsub.s32 %v1216, %v1218
        %v1220 = vrot.slane %v1210, %v1219
        %v1222 = vunpack.c.l.s4 1966171168
        %v1223 = vunpack.c.0.s8 %v1222
        %v1224 = vlaneseq
        %v1225 = vshrl.u32 %v1224, 7
        %v1226 = vsub.s32 %v1223, %v1225
        %v1227 = vrot.slane %v1211, %v1226
        %v1229 = vunpack.c.l.s4 1966171168
        %v1230 = vunpack.c.0.s8 %v1229
        %v1231 = vlaneseq
        %v1232 = vshrl.u32 %v1231, 7
        %v1233 = vsub.s32 %v1230, %v1232
        %v1234 = vrot.slane %v1212, %v1233
        %v1236 = vunpack.c.l.s4 1966171168
        %v1237 = vunpack.c.0.s8 %v1236
        %v1238 = vlaneseq
        %v1239 = vshrl.u32 %v1238, 7
        %v1240 = vsub.s32 %v1237, %v1239
        %v1241 = vrot.slane %v1213, %v1240
        %v1242 = vcombine.low %v1220, %v1227
        %v1243 = vcombine.low %v1234, %v1241
        %v1245 = vunpack.c.l.s4 1966171168
        %v1246 = vunpack.c.0.s8 %v1245
        %v1247 = vlaneseq
        %v1248 = vshrl.u32 %v1247, 7
        %v1249 = vsub.s32 %v1246, %v1248
        %v1250 = vrot.slane %v1242, %v1249
        %v1252 = vunpack.c.l.s4 1966171168
        %v1253 = vunpack.c.0.s8 %v1252
        %v1254 = vlaneseq
        %v1255 = vshrl.u32 %v1254, 7
        %v1256 = vsub.s32 %v1253, %v1255
        %v1257 = vrot.slane %v1243, %v1256
        %v1258 = vcombine.low %v1250, %v1257
        %v1259 = vcombine.low %v580, %v584
        %v1260 = vcombine.low %v588, %v592
        %v1261 = vcombine.low %v596, %v600
        %v1262 = vcombine.low %v604, %v608
        %v1264 = vunpack.c.l.s4 1966171168
        %v1265 = vunpack.c.0.s8 %v1264
        %v1266 = vlaneseq
        %v1267 = vshrl.u32 %v1266, 7
        %v1268 = vsub.s32 %v1265, %v1267
        %v1269 = vrot.slane %v1259, %v1268
        %v1271 = vunpack.c.l.s4 1966171168
        %v1272 = vunpack.c.0.s8 %v1271
        %v1273 = vlaneseq
        %v1274 = vshrl.u32 %v1273, 7
        %v1275 = vsub.s32 %v1272, %v1274
        %v1276 = vrot.slane %v1260, %v1275
        %v1278 = vunpack.c.l.s4 1966171168
        %v1279 = vunpack.c.0.s8 %v1278
        %v1280 = vlaneseq
        %v1281 = vshrl.u32 %v1280, 7
        %v1282 = vsub.s32 %v1279, %v1281
        %v1283 = vrot.slane %v1261, %v1282
        %v1285 = vunpack.c.l.s4 1966171168
        %v1286 = vunpack.c.0.s8 %v1285
        %v1287 = vlaneseq
        %v1288 = vshrl.u32 %v1287, 7
        %v1289 = vsub.s32 %v1286, %v1288
        %v1290 = vrot.slane %v1262, %v1289
        %v1291 = vcombine.low %v1269, %v1276
        %v1292 = vcombine.low %v1283, %v1290
        %v1294 = vunpack.c.l.s4 1966171168
        %v1295 = vunpack.c.0.s8 %v1294
        %v1296 = vlaneseq
        %v1297 = vshrl.u32 %v1296, 7
        %v1298 = vsub.s32 %v1295, %v1297
        %v1299 = vrot.slane %v1291, %v1298
        %v1301 = vunpack.c.l.s4 1966171168
        %v1302 = vunpack.c.0.s8 %v1301
        %v1303 = vlaneseq
        %v1304 = vshrl.u32 %v1303, 7
        %v1305 = vsub.s32 %v1302, %v1304
        %v1306 = vrot.slane %v1292, %v1305
        %v1307 = vcombine.low %v1299, %v1306
        %v1308 = vcombine.low %v612, %v616
        %v1309 = vcombine.low %v620, %v624
        %v1310 = vcombine.low %v628, %v632
        %v1311 = vcombine.low %v636, %v640
        %v1313 = vunpack.c.l.s4 1966171168
        %v1314 = vunpack.c.0.s8 %v1313
        %v1315 = vlaneseq
        %v1316 = vshrl.u32 %v1315, 7
        %v1317 = vsub.s32 %v1314, %v1316
        %v1318 = vrot.slane %v1308, %v1317
        %v1320 = vunpack.c.l.s4 1966171168
        %v1321 = vunpack.c.0.s8 %v1320
        %v1322 = vlaneseq
        %v1323 = vshrl.u32 %v1322, 7
        %v1324 = vsub.s32 %v1321, %v1323
        %v1325 = vrot.slane %v1309, %v1324
        %v1327 = vunpack.c.l.s4 1966171168
        %v1328 = vunpack.c.0.s8 %v1327
        %v1329 = vlaneseq
        %v1330 = vshrl.u32 %v1329, 7
        %v1331 = vsub.s32 %v1328, %v1330
        %v1332 = vrot.slane %v1310, %v1331
        %v1334 = vunpack.c.l.s4 1966171168
        %v1335 = vunpack.c.0.s8 %v1334
        %v1336 = vlaneseq
        %v1337 = vshrl.u32 %v1336, 7
        %v1338 = vsub.s32 %v1335, %v1337
        %v1339 = vrot.slane %v1311, %v1338
        %v1340 = vcombine.low %v1318, %v1325
        %v1341 = vcombine.low %v1332, %v1339
        %v1343 = vunpack.c.l.s4 1966171168
        %v1344 = vunpack.c.0.s8 %v1343
        %v1345 = vlaneseq
        %v1346 = vshrl.u32 %v1345, 7
        %v1347 = vsub.s32 %v1344, %v1346
        %v1348 = vrot.slane %v1340, %v1347
        %v1350 = vunpack.c.l.s4 1966171168
        %v1351 = vunpack.c.0.s8 %v1350
        %v1352 = vlaneseq
        %v1353 = vshrl.u32 %v1352, 7
        %v1354 = vsub.s32 %v1351, %v1353
        %v1355 = vrot.slane %v1341, %v1354
        %v1356 = vcombine.low %v1348, %v1355
        %v1357 = vcombine.low %v644, %v648
        %v1358 = vcombine.low %v652, %v656
        %v1359 = vcombine.low %v660, %v664
        %v1360 = vcombine.low %v668, %v672
        %v1362 = vunpack.c.l.s4 1966171168
        %v1363 = vunpack.c.0.s8 %v1362
        %v1364 = vlaneseq
        %v1365 = vshrl.u32 %v1364, 7
        %v1366 = vsub.s32 %v1363, %v1365
        %v1367 = vrot.slane %v1357, %v1366
        %v1369 = vunpack.c.l.s4 1966171168
        %v1370 = vunpack.c.0.s8 %v1369
        %v1371 = vlaneseq
        %v1372 = vshrl.u32 %v1371, 7
        %v1373 = vsub.s32 %v1370, %v1372
        %v1374 = vrot.slane %v1358, %v1373
        %v1376 = vunpack.c.l.s4 1966171168
        %v1377 = vunpack.c.0.s8 %v1376
        %v1378 = vlaneseq
        %v1379 = vshrl.u32 %v1378, 7
        %v1380 = vsub.s32 %v1377, %v1379
        %v1381 = vrot.slane %v1359, %v1380
        %v1383 = vunpack.c.l.s4 1966171168
        %v1384 = vunpack.c.0.s8 %v1383
        %v1385 = vlaneseq
        %v1386 = vshrl.u32 %v1385, 7
        %v1387 = vsub.s32 %v1384, %v1386
        %v1388 = vrot.slane %v1360, %v1387
        %v1389 = vcombine.low %v1367, %v1374
        %v1390 = vcombine.low %v1381, %v1388
        %v1392 = vunpack.c.l.s4 1966171168
        %v1393 = vunpack.c.0.s8 %v1392
        %v1394 = vlaneseq
        %v1395 = vshrl.u32 %v1394, 7
        %v1396 = vsub.s32 %v1393, %v1395
        %v1397 = vrot.slane %v1389, %v1396
        %v1399 = vunpack.c.l.s4 1966171168
        %v1400 = vunpack.c.0.s8 %v1399
        %v1401 = vlaneseq
        %v1402 = vshrl.u32 %v1401, 7
        %v1403 = vsub.s32 %v1400, %v1402
        %v1404 = vrot.slane %v1390, %v1403
        %v1405 = vcombine.low %v1397, %v1404
        %v1406 = vcombine.low %v676, %v680
        %v1407 = vcombine.low %v684, %v688
        %v1408 = vcombine.low %v692, %v696
        %v1409 = vcombine.low %v700, %v704
        %v1411 = vunpack.c.l.s4 1966171168
        %v1412 = vunpack.c.0.s8 %v1411
        %v1413 = vlaneseq
        %v1414 = vshrl.u32 %v1413, 7
        %v1415 = vsub.s32 %v1412, %v1414
        %v1416 = vrot.slane %v1406, %v1415
        %v1418 = vunpack.c.l.s4 1966171168
        %v1419 = vunpack.c.0.s8 %v1418
        %v1420 = vlaneseq
        %v1421 = vshrl.u32 %v1420, 7
        %v1422 = vsub.s32 %v1419, %v1421
        %v1423 = vrot.slane %v1407, %v1422
        %v1425 = vunpack.c.l.s4 1966171168
        %v1426 = vunpack.c.0.s8 %v1425
        %v1427 = vlaneseq
        %v1428 = vshrl.u32 %v1427, 7
        %v1429 = vsub.s32 %v1426, %v1428
        %v1430 = vrot.slane %v1408, %v1429
        %v1432 = vunpack.c.l.s4 1966171168
        %v1433 = vunpack.c.0.s8 %v1432
        %v1434 = vlaneseq
        %v1435 = vshrl.u32 %v1434, 7
        %v1436 = vsub.s32 %v1433, %v1435
        %v1437 = vrot.slane %v1409, %v1436
        %v1438 = vcombine.low %v1416, %v1423
        %v1439 = vcombine.low %v1430, %v1437
        %v1441 = vunpack.c.l.s4 1966171168
        %v1442 = vunpack.c.0.s8 %v1441
        %v1443 = vlaneseq
        %v1444 = vshrl.u32 %v1443, 7
        %v1445 = vsub.s32 %v1442, %v1444
        %v1446 = vrot.slane %v1438, %v1445
        %v1448 = vunpack.c.l.s4 1966171168
        %v1449 = vunpack.c.0.s8 %v1448
        %v1450 = vlaneseq
        %v1451 = vshrl.u32 %v1450, 7
        %v1452 = vsub.s32 %v1449, %v1451
        %v1453 = vrot.slane %v1439, %v1452
        %v1454 = vcombine.low %v1446, %v1453
        %v1455 = vcombine.low %v708, %v712
        %v1456 = vcombine.low %v716, %v720
        %v1457 = vcombine.low %v724, %v728
        %v1458 = vcombine.low %v732, %v736
        %v1460 = vunpack.c.l.s4 1966171168
        %v1461 = vunpack.c.0.s8 %v1460
        %v1462 = vlaneseq
        %v1463 = vshrl.u32 %v1462, 7
        %v1464 = vsub.s32 %v1461, %v1463
        %v1465 = vrot.slane %v1455, %v1464
        %v1467 = vunpack.c.l.s4 1966171168
        %v1468 = vunpack.c.0.s8 %v1467
        %v1469 = vlaneseq
        %v1470 = vshrl.u32 %v1469, 7
        %v1471 = vsub.s32 %v1468, %v1470
        %v1472 = vrot.slane %v1456, %v1471
        %v1474 = vunpack.c.l.s4 1966171168
        %v1475 = vunpack.c.0.s8 %v1474
        %v1476 = vlaneseq
        %v1477 = vshrl.u32 %v1476, 7
        %v1478 = vsub.s32 %v1475, %v1477
        %v1479 = vrot.slane %v1457, %v1478
        %v1481 = vunpack.c.l.s4 1966171168
        %v1482 = vunpack.c.0.s8 %v1481
        %v1483 = vlaneseq
        %v1484 = vshrl.u32 %v1483, 7
        %v1485 = vsub.s32 %v1482, %v1484
        %v1486 = vrot.slane %v1458, %v1485
        %v1487 = vcombine.low %v1465, %v1472
        %v1488 = vcombine.low %v1479, %v1486
        %v1490 = vunpack.c.l.s4 1966171168
        %v1491 = vunpack.c.0.s8 %v1490
        %v1492 = vlaneseq
        %v1493 = vshrl.u32 %v1492, 7
        %v1494 = vsub.s32 %v1491, %v1493
        %v1495 = vrot.slane %v1487, %v1494
        %v1497 = vunpack.c.l.s4 1966171168
        %v1498 = vunpack.c.0.s8 %v1497
        %v1499 = vlaneseq
        %v1500 = vshrl.u32 %v1499, 7
        %v1501 = vsub.s32 %v1498, %v1500
        %v1502 = vrot.slane %v1488, %v1501
        %v1503 = vcombine.low %v1495, %v1502
        %v1504 = vcombine.low %v740, %v744
        %v1505 = vcombine.low %v748, %v752
        %v1506 = vcombine.low %v756, %v760
        %v1507 = vcombine.low %v764, %v768
        %v1509 = vunpack.c.l.s4 1966171168
        %v1510 = vunpack.c.0.s8 %v1509
        %v1511 = vlaneseq
        %v1512 = vshrl.u32 %v1511, 7
        %v1513 = vsub.s32 %v1510, %v1512
        %v1514 = vrot.slane %v1504, %v1513
        %v1516 = vunpack.c.l.s4 1966171168
        %v1517 = vunpack.c.0.s8 %v1516
        %v1518 = vlaneseq
        %v1519 = vshrl.u32 %v1518, 7
        %v1520 = vsub.s32 %v1517, %v1519
        %v1521 = vrot.slane %v1505, %v1520
        %v1523 = vunpack.c.l.s4 1966171168
        %v1524 = vunpack.c.0.s8 %v1523
        %v1525 = vlaneseq
        %v1526 = vshrl.u32 %v1525, 7
        %v1527 = vsub.s32 %v1524, %v1526
        %v1528 = vrot.slane %v1506, %v1527
        %v1530 = vunpack.c.l.s4 1966171168
        %v1531 = vunpack.c.0.s8 %v1530
        %v1532 = vlaneseq
        %v1533 = vshrl.u32 %v1532, 7
        %v1534 = vsub.s32 %v1531, %v1533
        %v1535 = vrot.slane %v1507, %v1534
        %v1536 = vcombine.low %v1514, %v1521
        %v1537 = vcombine.low %v1528, %v1535
        %v1539 = vunpack.c.l.s4 1966171168
        %v1540 = vunpack.c.0.s8 %v1539
        %v1541 = vlaneseq
        %v1542 = vshrl.u32 %v1541, 7
        %v1543 = vsub.s32 %v1540, %v1542
        %v1544 = vrot.slane %v1536, %v1543
        %v1546 = vunpack.c.l.s4 1966171168
        %v1547 = vunpack.c.0.s8 %v1546
        %v1548 = vlaneseq
        %v1549 = vshrl.u32 %v1548, 7
        %v1550 = vsub.s32 %v1547, %v1549
        %v1551 = vrot.slane %v1537, %v1550
        %v1552 = vcombine.low %v1544, %v1551
        %1553 = vset.pattern.permute.xlu0 0
        %1554 = vperm.xlu0 %1553, %v817
        %v1555 = vpop.permute.xlu0 %1554
        %1556 = vset.pattern.permute.xlu0 0
        %1557 = vperm.xlu0 %1556, %v866
        %v1558 = vpop.permute.xlu0 %1557
        %1559 = vset.pattern.permute.xlu0 0
        %1560 = vperm.xlu0 %1559, %v915
        %v1561 = vpop.permute.xlu0 %1560
        %1562 = vset.pattern.permute.xlu0 0
        %1563 = vperm.xlu0 %1562, %v964
        %v1564 = vpop.permute.xlu0 %1563
        %1565 = vset.pattern.permute.xlu0 0
        %1566 = vperm.xlu0 %1565, %v1013
        %v1567 = vpop.permute.xlu0 %1566
        %1568 = vset.pattern.permute.xlu0 0
        %1569 = vperm.xlu0 %1568, %v1062
        %v1570 = vpop.permute.xlu0 %1569
        %1571 = vset.pattern.permute.xlu0 0
        %1572 = vperm.xlu0 %1571, %v1111
        %v1573 = vpop.permute.xlu0 %1572
        %1574 = vset.pattern.permute.xlu0 0
        %1575 = vperm.xlu0 %1574, %v1160
        %v1576 = vpop.permute.xlu0 %1575
        %1577 = vset.pattern.permute.xlu0 0
        %1578 = vperm.xlu0 %1577, %v1209
        %v1579 = vpop.permute.xlu0 %1578
        %1580 = vset.pattern.permute.xlu0 0
        %1581 = vperm.xlu0 %1580, %v1258
        %v1582 = vpop.permute.xlu0 %1581
        %1583 = vset.pattern.permute.xlu0 0
        %1584 = vperm.xlu0 %1583, %v1307
        %v1585 = vpop.permute.xlu0 %1584
        %1586 = vset.pattern.permute.xlu0 0
        %1587 = vperm.xlu0 %1586, %v1356
        %v1588 = vpop.permute.xlu0 %1587
        %1589 = vset.pattern.permute.xlu0 0
        %1590 = vperm.xlu0 %1589, %v1405
        %v1591 = vpop.permute.xlu0 %1590
        %1592 = vset.pattern.permute.xlu0 0
        %1593 = vperm.xlu0 %1592, %v1454
        %v1594 = vpop.permute.xlu0 %1593
        %1595 = vset.pattern.permute.xlu0 0
        %1596 = vperm.xlu0 %1595, %v1503
        %v1597 = vpop.permute.xlu0 %1596
        %1598 = vset.pattern.permute.xlu0 0
        %1599 = vperm.xlu0 %1598, %v1552
        %v1600 = vpop.permute.xlu0 %1599
        %v1601 = vlaneseq
        %v1602 = vand.u32 %v1601, 127
        %v1603 = vlaneseq
        %v1604 = vshrl.u32 %v1603, 7
        %v1605 = vsub.s32 %v1602, %v1604
        %v1606 = vrot.slane %v1555, %v1605
        %v1607 = vadd.s32 %v1602, 4294967288
        %v1608 = vlaneseq
        %v1609 = vshrl.u32 %v1608, 7
        %v1610 = vsub.s32 %v1607, %v1609
        %v1611 = vrot.slane %v1558, %v1610
        %vm1612 = vcmask 130112
        %v1613 = vsel %vm1612, %v1611, %v1606
        %v1614 = vadd.s32 %v1602, 4294967280
        %v1615 = vlaneseq
        %v1616 = vshrl.u32 %v1615, 7
        %v1617 = vsub.s32 %v1614, %v1616
        %v1618 = vrot.slane %v1561, %v1617
        %vm1619 = vcmask 195712
        %v1620 = vsel %vm1619, %v1618, %v1613
        %v1621 = vadd.s32 %v1602, 4294967272
        %v1622 = vlaneseq
        %v1623 = vshrl.u32 %v1622, 7
        %v1624 = vsub.s32 %v1621, %v1623
        %v1625 = vrot.slane %v1564, %v1624
        %vm1626 = vcmask 261312
        %v1627 = vsel %vm1626, %v1625, %v1620
        %v1628 = vadd.s32 %v1602, 4294967264
        %v1629 = vlaneseq
        %v1630 = vshrl.u32 %v1629, 7
        %v1631 = vsub.s32 %v1628, %v1630
        %v1632 = vrot.slane %v1567, %v1631
        %vm1633 = vcmask 326912
        %v1634 = vsel %vm1633, %v1632, %v1627
        %v1635 = vadd.s32 %v1602, 4294967256
        %v1636 = vlaneseq
        %v1637 = vshrl.u32 %v1636, 7
        %v1638 = vsub.s32 %v1635, %v1637
        %v1639 = vrot.slane %v1570, %v1638
        %vm1640 = vcmask 392512
        %v1641 = vsel %vm1640, %v1639, %v1634
        %v1642 = vadd.s32 %v1602, 4294967248
        %v1643 = vlaneseq
        %v1644 = vshrl.u32 %v1643, 7
        %v1645 = vsub.s32 %v1642, %v1644
        %v1646 = vrot.slane %v1573, %v1645
        %vm1647 = vcmask 458112
        %v1648 = vsel %vm1647, %v1646, %v1641
        %v1649 = vadd.s32 %v1602, 4294967240
        %v1650 = vlaneseq
        %v1651 = vshrl.u32 %v1650, 7
        %v1652 = vsub.s32 %v1649, %v1651
        %v1653 = vrot.slane %v1576, %v1652
        %vm1654 = vcmask 523712
        %v1655 = vsel %vm1654, %v1653, %v1648
        %v1656 = vadd.s32 %v1602, 4294967232
        %v1657 = vlaneseq
        %v1658 = vshrl.u32 %v1657, 7
        %v1659 = vsub.s32 %v1656, %v1658
        %v1660 = vrot.slane %v1579, %v1659
        %vm1661 = vcmask 589312
        %v1662 = vsel %vm1661, %v1660, %v1655
        %v1663 = vadd.s32 %v1602, 4294967224
        %v1664 = vlaneseq
        %v1665 = vshrl.u32 %v1664, 7
        %v1666 = vsub.s32 %v1663, %v1665
        %v1667 = vrot.slane %v1582, %v1666
        %vm1668 = vcmask 654912
        %v1669 = vsel %vm1668, %v1667, %v1662
        %v1670 = vadd.s32 %v1602, 4294967216
        %v1671 = vlaneseq
        %v1672 = vshrl.u32 %v1671, 7
        %v1673 = vsub.s32 %v1670, %v1672
        %v1674 = vrot.slane %v1585, %v1673
        %vm1675 = vcmask 720512
        %v1676 = vsel %vm1675, %v1674, %v1669
        %v1677 = vadd.s32 %v1602, 4294967208
        %v1678 = vlaneseq
        %v1679 = vshrl.u32 %v1678, 7
        %v1680 = vsub.s32 %v1677, %v1679
        %v1681 = vrot.slane %v1588, %v1680
        %vm1682 = vcmask 786112
        %v1683 = vsel %vm1682, %v1681, %v1676
        %v1684 = vadd.s32 %v1602, 4294967200
        %v1685 = vlaneseq
        %v1686 = vshrl.u32 %v1685, 7
        %v1687 = vsub.s32 %v1684, %v1686
        %v1688 = vrot.slane %v1591, %v1687
        %vm1689 = vcmask 851712
        %v1690 = vsel %vm1689, %v1688, %v1683
        %v1691 = vadd.s32 %v1602, 4294967192
        %v1692 = vlaneseq
        %v1693 = vshrl.u32 %v1692, 7
        %v1694 = vsub.s32 %v1691, %v1693
        %v1695 = vrot.slane %v1594, %v1694
        %vm1696 = vcmask 917312
        %v1697 = vsel %vm1696, %v1695, %v1690
        %v1698 = vadd.s32 %v1602, 4294967184
        %v1699 = vlaneseq
        %v1700 = vshrl.u32 %v1699, 7
        %v1701 = vsub.s32 %v1698, %v1700
        %v1702 = vrot.slane %v1597, %v1701
        %vm1703 = vcmask 982912
        %v1704 = vsel %vm1703, %v1702, %v1697
        %v1705 = vadd.s32 %v1602, 4294967176
        %v1706 = vlaneseq
        %v1707 = vshrl.u32 %v1706, 7
        %v1708 = vsub.s32 %v1705, %v1707
        %v1709 = vrot.slane %v1600, %v1708
        %vm1710 = vcmask 1048512
        %v1711 = vsel %vm1710, %v1709, %v1704
        %v1713 = vunpack.c.l.s4 1966171168
        %v1714 = vunpack.c.0.s8 %v1713
        %v1715 = vlaneseq
        %v1716 = vshrl.u32 %v1715, 7
        %v1717 = vsub.s32 %v1714, %v1716
        %v1718 = vrot.slane %v1711, %v1717
        %v1720 = vunpack.c.l.s4 1966171168
        %v1721 = vunpack.c.0.s8 %v1720
        %v1722 = vlaneseq
        %v1723 = vshrl.u32 %v1722, 7
        %v1724 = vsub.s32 %v1721, %v1723
        %v1725 = vrot.slane %v1718, %v1724
        %v1727 = vadd.f32 %v208, %v1725
        %1728 = vst [vmem:[%s179] sm:$0x1] %v1727
        %v1729 = vld [vmem:[%s185] sm:$0x1]
        %1730 = vmax.xlane.f32.xlu0 %v192
        %v1731 = vpop.xlane.xlu0 %1730
        %1732 = vmax.xlane.f32.xlu0 %v193
        %v1733 = vpop.xlane.xlu0 %1732
        %1734 = vmax.xlane.f32.xlu0 %v194
        %v1735 = vpop.xlane.xlu0 %1734
        %1736 = vmax.xlane.f32.xlu0 %v195
        %v1737 = vpop.xlane.xlu0 %1736
        %1738 = vmax.xlane.f32.xlu0 %v196
        %v1739 = vpop.xlane.xlu0 %1738
        %1740 = vmax.xlane.f32.xlu0 %v197
        %v1741 = vpop.xlane.xlu0 %1740
        %1742 = vmax.xlane.f32.xlu0 %v198
        %v1743 = vpop.xlane.xlu0 %1742
        %1744 = vmax.xlane.f32.xlu0 %v199
        %v1745 = vpop.xlane.xlu0 %1744
        %1746 = vmax.xlane.f32.xlu0 %v200
        %v1747 = vpop.xlane.xlu0 %1746
        %1748 = vmax.xlane.f32.xlu0 %v201
        %v1749 = vpop.xlane.xlu0 %1748
        %1750 = vmax.xlane.f32.xlu0 %v202
        %v1751 = vpop.xlane.xlu0 %1750
        %1752 = vmax.xlane.f32.xlu0 %v203
        %v1753 = vpop.xlane.xlu0 %1752
        %1754 = vmax.xlane.f32.xlu0 %v204
        %v1755 = vpop.xlane.xlu0 %1754
        %1756 = vmax.xlane.f32.xlu0 %v205
        %v1757 = vpop.xlane.xlu0 %1756
        %1758 = vmax.xlane.f32.xlu0 %v206
        %v1759 = vpop.xlane.xlu0 %1758
        %1760 = vmax.xlane.f32.xlu0 %v207
        %v1761 = vpop.xlane.xlu0 %1760
        %v1778 = vlaneseq
        %v1779 = vshrl.u32 %v1778, 7
        %v1780 = vsub.s32 0, %v1779
        %v1781 = vrot.slane %v1731, %v1780
        %v1782 = vlaneseq
        %v1783 = vshrl.u32 %v1782, 7
        %v1784 = vsub.s32 1, %v1783
        %v1785 = vrot.slane %v1731, %v1784
        %v1786 = vlaneseq
        %v1787 = vshrl.u32 %v1786, 7
        %v1788 = vsub.s32 2, %v1787
        %v1789 = vrot.slane %v1731, %v1788
        %v1790 = vlaneseq
        %v1791 = vshrl.u32 %v1790, 7
        %v1792 = vsub.s32 3, %v1791
        %v1793 = vrot.slane %v1731, %v1792
        %v1794 = vlaneseq
        %v1795 = vshrl.u32 %v1794, 7
        %v1796 = vsub.s32 4, %v1795
        %v1797 = vrot.slane %v1731, %v1796
        %v1798 = vlaneseq
        %v1799 = vshrl.u32 %v1798, 7
        %v1800 = vsub.s32 5, %v1799
        %v1801 = vrot.slane %v1731, %v1800
        %v1802 = vlaneseq
        %v1803 = vshrl.u32 %v1802, 7
        %v1804 = vsub.s32 6, %v1803
        %v1805 = vrot.slane %v1731, %v1804
        %v1806 = vlaneseq
        %v1807 = vshrl.u32 %v1806, 7
        %v1808 = vsub.s32 7, %v1807
        %v1809 = vrot.slane %v1731, %v1808
        %v1810 = vlaneseq
        %v1811 = vshrl.u32 %v1810, 7
        %v1812 = vsub.s32 0, %v1811
        %v1813 = vrot.slane %v1733, %v1812
        %v1814 = vlaneseq
        %v1815 = vshrl.u32 %v1814, 7
        %v1816 = vsub.s32 1, %v1815
        %v1817 = vrot.slane %v1733, %v1816
        %v1818 = vlaneseq
        %v1819 = vshrl.u32 %v1818, 7
        %v1820 = vsub.s32 2, %v1819
        %v1821 = vrot.slane %v1733, %v1820
        %v1822 = vlaneseq
        %v1823 = vshrl.u32 %v1822, 7
        %v1824 = vsub.s32 3, %v1823
        %v1825 = vrot.slane %v1733, %v1824
        %v1826 = vlaneseq
        %v1827 = vshrl.u32 %v1826, 7
        %v1828 = vsub.s32 4, %v1827
        %v1829 = vrot.slane %v1733, %v1828
        %v1830 = vlaneseq
        %v1831 = vshrl.u32 %v1830, 7
        %v1832 = vsub.s32 5, %v1831
        %v1833 = vrot.slane %v1733, %v1832
        %v1834 = vlaneseq
        %v1835 = vshrl.u32 %v1834, 7
        %v1836 = vsub.s32 6, %v1835
        %v1837 = vrot.slane %v1733, %v1836
        %v1838 = vlaneseq
        %v1839 = vshrl.u32 %v1838, 7
        %v1840 = vsub.s32 7, %v1839
        %v1841 = vrot.slane %v1733, %v1840
        %v1842 = vlaneseq
        %v1843 = vshrl.u32 %v1842, 7
        %v1844 = vsub.s32 0, %v1843
        %v1845 = vrot.slane %v1735, %v1844
        %v1846 = vlaneseq
        %v1847 = vshrl.u32 %v1846, 7
        %v1848 = vsub.s32 1, %v1847
        %v1849 = vrot.slane %v1735, %v1848
        %v1850 = vlaneseq
        %v1851 = vshrl.u32 %v1850, 7
        %v1852 = vsub.s32 2, %v1851
        %v1853 = vrot.slane %v1735, %v1852
        %v1854 = vlaneseq
        %v1855 = vshrl.u32 %v1854, 7
        %v1856 = vsub.s32 3, %v1855
        %v1857 = vrot.slane %v1735, %v1856
        %v1858 = vlaneseq
        %v1859 = vshrl.u32 %v1858, 7
        %v1860 = vsub.s32 4, %v1859
        %v1861 = vrot.slane %v1735, %v1860
        %v1862 = vlaneseq
        %v1863 = vshrl.u32 %v1862, 7
        %v1864 = vsub.s32 5, %v1863
        %v1865 = vrot.slane %v1735, %v1864
        %v1866 = vlaneseq
        %v1867 = vshrl.u32 %v1866, 7
        %v1868 = vsub.s32 6, %v1867
        %v1869 = vrot.slane %v1735, %v1868
        %v1870 = vlaneseq
        %v1871 = vshrl.u32 %v1870, 7
        %v1872 = vsub.s32 7, %v1871
        %v1873 = vrot.slane %v1735, %v1872
        %v1874 = vlaneseq
        %v1875 = vshrl.u32 %v1874, 7
        %v1876 = vsub.s32 0, %v1875
        %v1877 = vrot.slane %v1737, %v1876
        %v1878 = vlaneseq
        %v1879 = vshrl.u32 %v1878, 7
        %v1880 = vsub.s32 1, %v1879
        %v1881 = vrot.slane %v1737, %v1880
        %v1882 = vlaneseq
        %v1883 = vshrl.u32 %v1882, 7
        %v1884 = vsub.s32 2, %v1883
        %v1885 = vrot.slane %v1737, %v1884
        %v1886 = vlaneseq
        %v1887 = vshrl.u32 %v1886, 7
        %v1888 = vsub.s32 3, %v1887
        %v1889 = vrot.slane %v1737, %v1888
        %v1890 = vlaneseq
        %v1891 = vshrl.u32 %v1890, 7
        %v1892 = vsub.s32 4, %v1891
        %v1893 = vrot.slane %v1737, %v1892
        %v1894 = vlaneseq
        %v1895 = vshrl.u32 %v1894, 7
        %v1896 = vsub.s32 5, %v1895
        %v1897 = vrot.slane %v1737, %v1896
        %v1898 = vlaneseq
        %v1899 = vshrl.u32 %v1898, 7
        %v1900 = vsub.s32 6, %v1899
        %v1901 = vrot.slane %v1737, %v1900
        %v1902 = vlaneseq
        %v1903 = vshrl.u32 %v1902, 7
        %v1904 = vsub.s32 7, %v1903
        %v1905 = vrot.slane %v1737, %v1904
        %v1906 = vlaneseq
        %v1907 = vshrl.u32 %v1906, 7
        %v1908 = vsub.s32 0, %v1907
        %v1909 = vrot.slane %v1739, %v1908
        %v1910 = vlaneseq
        %v1911 = vshrl.u32 %v1910, 7
        %v1912 = vsub.s32 1, %v1911
        %v1913 = vrot.slane %v1739, %v1912
        %v1914 = vlaneseq
        %v1915 = vshrl.u32 %v1914, 7
        %v1916 = vsub.s32 2, %v1915
        %v1917 = vrot.slane %v1739, %v1916
        %v1918 = vlaneseq
        %v1919 = vshrl.u32 %v1918, 7
        %v1920 = vsub.s32 3, %v1919
        %v1921 = vrot.slane %v1739, %v1920
        %v1922 = vlaneseq
        %v1923 = vshrl.u32 %v1922, 7
        %v1924 = vsub.s32 4, %v1923
        %v1925 = vrot.slane %v1739, %v1924
        %v1926 = vlaneseq
        %v1927 = vshrl.u32 %v1926, 7
        %v1928 = vsub.s32 5, %v1927
        %v1929 = vrot.slane %v1739, %v1928
        %v1930 = vlaneseq
        %v1931 = vshrl.u32 %v1930, 7
        %v1932 = vsub.s32 6, %v1931
        %v1933 = vrot.slane %v1739, %v1932
        %v1934 = vlaneseq
        %v1935 = vshrl.u32 %v1934, 7
        %v1936 = vsub.s32 7, %v1935
        %v1937 = vrot.slane %v1739, %v1936
        %v1938 = vlaneseq
        %v1939 = vshrl.u32 %v1938, 7
        %v1940 = vsub.s32 0, %v1939
        %v1941 = vrot.slane %v1741, %v1940
        %v1942 = vlaneseq
        %v1943 = vshrl.u32 %v1942, 7
        %v1944 = vsub.s32 1, %v1943
        %v1945 = vrot.slane %v1741, %v1944
        %v1946 = vlaneseq
        %v1947 = vshrl.u32 %v1946, 7
        %v1948 = vsub.s32 2, %v1947
        %v1949 = vrot.slane %v1741, %v1948
        %v1950 = vlaneseq
        %v1951 = vshrl.u32 %v1950, 7
        %v1952 = vsub.s32 3, %v1951
        %v1953 = vrot.slane %v1741, %v1952
        %v1954 = vlaneseq
        %v1955 = vshrl.u32 %v1954, 7
        %v1956 = vsub.s32 4, %v1955
        %v1957 = vrot.slane %v1741, %v1956
        %v1958 = vlaneseq
        %v1959 = vshrl.u32 %v1958, 7
        %v1960 = vsub.s32 5, %v1959
        %v1961 = vrot.slane %v1741, %v1960
        %v1962 = vlaneseq
        %v1963 = vshrl.u32 %v1962, 7
        %v1964 = vsub.s32 6, %v1963
        %v1965 = vrot.slane %v1741, %v1964
        %v1966 = vlaneseq
        %v1967 = vshrl.u32 %v1966, 7
        %v1968 = vsub.s32 7, %v1967
        %v1969 = vrot.slane %v1741, %v1968
        %v1970 = vlaneseq
        %v1971 = vshrl.u32 %v1970, 7
        %v1972 = vsub.s32 0, %v1971
        %v1973 = vrot.slane %v1743, %v1972
        %v1974 = vlaneseq
        %v1975 = vshrl.u32 %v1974, 7
        %v1976 = vsub.s32 1, %v1975
        %v1977 = vrot.slane %v1743, %v1976
        %v1978 = vlaneseq
        %v1979 = vshrl.u32 %v1978, 7
        %v1980 = vsub.s32 2, %v1979
        %v1981 = vrot.slane %v1743, %v1980
        %v1982 = vlaneseq
        %v1983 = vshrl.u32 %v1982, 7
        %v1984 = vsub.s32 3, %v1983
        %v1985 = vrot.slane %v1743, %v1984
        %v1986 = vlaneseq
        %v1987 = vshrl.u32 %v1986, 7
        %v1988 = vsub.s32 4, %v1987
        %v1989 = vrot.slane %v1743, %v1988
        %v1990 = vlaneseq
        %v1991 = vshrl.u32 %v1990, 7
        %v1992 = vsub.s32 5, %v1991
        %v1993 = vrot.slane %v1743, %v1992
        %v1994 = vlaneseq
        %v1995 = vshrl.u32 %v1994, 7
        %v1996 = vsub.s32 6, %v1995
        %v1997 = vrot.slane %v1743, %v1996
        %v1998 = vlaneseq
        %v1999 = vshrl.u32 %v1998, 7
        %v2000 = vsub.s32 7, %v1999
        %v2001 = vrot.slane %v1743, %v2000
        %v2002 = vlaneseq
        %v2003 = vshrl.u32 %v2002, 7
        %v2004 = vsub.s32 0, %v2003
        %v2005 = vrot.slane %v1745, %v2004
        %v2006 = vlaneseq
        %v2007 = vshrl.u32 %v2006, 7
        %v2008 = vsub.s32 1, %v2007
        %v2009 = vrot.slane %v1745, %v2008
        %v2010 = vlaneseq
        %v2011 = vshrl.u32 %v2010, 7
        %v2012 = vsub.s32 2, %v2011
        %v2013 = vrot.slane %v1745, %v2012
        %v2014 = vlaneseq
        %v2015 = vshrl.u32 %v2014, 7
        %v2016 = vsub.s32 3, %v2015
        %v2017 = vrot.slane %v1745, %v2016
        %v2018 = vlaneseq
        %v2019 = vshrl.u32 %v2018, 7
        %v2020 = vsub.s32 4, %v2019
        %v2021 = vrot.slane %v1745, %v2020
        %v2022 = vlaneseq
        %v2023 = vshrl.u32 %v2022, 7
        %v2024 = vsub.s32 5, %v2023
        %v2025 = vrot.slane %v1745, %v2024
        %v2026 = vlaneseq
        %v2027 = vshrl.u32 %v2026, 7
        %v2028 = vsub.s32 6, %v2027
        %v2029 = vrot.slane %v1745, %v2028
        %v2030 = vlaneseq
        %v2031 = vshrl.u32 %v2030, 7
        %v2032 = vsub.s32 7, %v2031
        %v2033 = vrot.slane %v1745, %v2032
        %v2034 = vlaneseq
        %v2035 = vshrl.u32 %v2034, 7
        %v2036 = vsub.s32 0, %v2035
        %v2037 = vrot.slane %v1747, %v2036
        %v2038 = vlaneseq
        %v2039 = vshrl.u32 %v2038, 7
        %v2040 = vsub.s32 1, %v2039
        %v2041 = vrot.slane %v1747, %v2040
        %v2042 = vlaneseq
        %v2043 = vshrl.u32 %v2042, 7
        %v2044 = vsub.s32 2, %v2043
        %v2045 = vrot.slane %v1747, %v2044
        %v2046 = vlaneseq
        %v2047 = vshrl.u32 %v2046, 7
        %v2048 = vsub.s32 3, %v2047
        %v2049 = vrot.slane %v1747, %v2048
        %v2050 = vlaneseq
        %v2051 = vshrl.u32 %v2050, 7
        %v2052 = vsub.s32 4, %v2051
        %v2053 = vrot.slane %v1747, %v2052
        %v2054 = vlaneseq
        %v2055 = vshrl.u32 %v2054, 7
        %v2056 = vsub.s32 5, %v2055
        %v2057 = vrot.slane %v1747, %v2056
        %v2058 = vlaneseq
        %v2059 = vshrl.u32 %v2058, 7
        %v2060 = vsub.s32 6, %v2059
        %v2061 = vrot.slane %v1747, %v2060
        %v2062 = vlaneseq
        %v2063 = vshrl.u32 %v2062, 7
        %v2064 = vsub.s32 7, %v2063
        %v2065 = vrot.slane %v1747, %v2064
        %v2066 = vlaneseq
        %v2067 = vshrl.u32 %v2066, 7
        %v2068 = vsub.s32 0, %v2067
        %v2069 = vrot.slane %v1749, %v2068
        %v2070 = vlaneseq
        %v2071 = vshrl.u32 %v2070, 7
        %v2072 = vsub.s32 1, %v2071
        %v2073 = vrot.slane %v1749, %v2072
        %v2074 = vlaneseq
        %v2075 = vshrl.u32 %v2074, 7
        %v2076 = vsub.s32 2, %v2075
        %v2077 = vrot.slane %v1749, %v2076
        %v2078 = vlaneseq
        %v2079 = vshrl.u32 %v2078, 7
        %v2080 = vsub.s32 3, %v2079
        %v2081 = vrot.slane %v1749, %v2080
        %v2082 = vlaneseq
        %v2083 = vshrl.u32 %v2082, 7
        %v2084 = vsub.s32 4, %v2083
        %v2085 = vrot.slane %v1749, %v2084
        %v2086 = vlaneseq
        %v2087 = vshrl.u32 %v2086, 7
        %v2088 = vsub.s32 5, %v2087
        %v2089 = vrot.slane %v1749, %v2088
        %v2090 = vlaneseq
        %v2091 = vshrl.u32 %v2090, 7
        %v2092 = vsub.s32 6, %v2091
        %v2093 = vrot.slane %v1749, %v2092
        %v2094 = vlaneseq
        %v2095 = vshrl.u32 %v2094, 7
        %v2096 = vsub.s32 7, %v2095
        %v2097 = vrot.slane %v1749, %v2096
        %v2098 = vlaneseq
        %v2099 = vshrl.u32 %v2098, 7
        %v2100 = vsub.s32 0, %v2099
        %v2101 = vrot.slane %v1751, %v2100
        %v2102 = vlaneseq
        %v2103 = vshrl.u32 %v2102, 7
        %v2104 = vsub.s32 1, %v2103
        %v2105 = vrot.slane %v1751, %v2104
        %v2106 = vlaneseq
        %v2107 = vshrl.u32 %v2106, 7
        %v2108 = vsub.s32 2, %v2107
        %v2109 = vrot.slane %v1751, %v2108
        %v2110 = vlaneseq
        %v2111 = vshrl.u32 %v2110, 7
        %v2112 = vsub.s32 3, %v2111
        %v2113 = vrot.slane %v1751, %v2112
        %v2114 = vlaneseq
        %v2115 = vshrl.u32 %v2114, 7
        %v2116 = vsub.s32 4, %v2115
        %v2117 = vrot.slane %v1751, %v2116
        %v2118 = vlaneseq
        %v2119 = vshrl.u32 %v2118, 7
        %v2120 = vsub.s32 5, %v2119
        %v2121 = vrot.slane %v1751, %v2120
        %v2122 = vlaneseq
        %v2123 = vshrl.u32 %v2122, 7
        %v2124 = vsub.s32 6, %v2123
        %v2125 = vrot.slane %v1751, %v2124
        %v2126 = vlaneseq
        %v2127 = vshrl.u32 %v2126, 7
        %v2128 = vsub.s32 7, %v2127
        %v2129 = vrot.slane %v1751, %v2128
        %v2130 = vlaneseq
        %v2131 = vshrl.u32 %v2130, 7
        %v2132 = vsub.s32 0, %v2131
        %v2133 = vrot.slane %v1753, %v2132
        %v2134 = vlaneseq
        %v2135 = vshrl.u32 %v2134, 7
        %v2136 = vsub.s32 1, %v2135
        %v2137 = vrot.slane %v1753, %v2136
        %v2138 = vlaneseq
        %v2139 = vshrl.u32 %v2138, 7
        %v2140 = vsub.s32 2, %v2139
        %v2141 = vrot.slane %v1753, %v2140
        %v2142 = vlaneseq
        %v2143 = vshrl.u32 %v2142, 7
        %v2144 = vsub.s32 3, %v2143
        %v2145 = vrot.slane %v1753, %v2144
        %v2146 = vlaneseq
        %v2147 = vshrl.u32 %v2146, 7
        %v2148 = vsub.s32 4, %v2147
        %v2149 = vrot.slane %v1753, %v2148
        %v2150 = vlaneseq
        %v2151 = vshrl.u32 %v2150, 7
        %v2152 = vsub.s32 5, %v2151
        %v2153 = vrot.slane %v1753, %v2152
        %v2154 = vlaneseq
        %v2155 = vshrl.u32 %v2154, 7
        %v2156 = vsub.s32 6, %v2155
        %v2157 = vrot.slane %v1753, %v2156
        %v2158 = vlaneseq
        %v2159 = vshrl.u32 %v2158, 7
        %v2160 = vsub.s32 7, %v2159
        %v2161 = vrot.slane %v1753, %v2160
        %v2162 = vlaneseq
        %v2163 = vshrl.u32 %v2162, 7
        %v2164 = vsub.s32 0, %v2163
        %v2165 = vrot.slane %v1755, %v2164
        %v2166 = vlaneseq
        %v2167 = vshrl.u32 %v2166, 7
        %v2168 = vsub.s32 1, %v2167
        %v2169 = vrot.slane %v1755, %v2168
        %v2170 = vlaneseq
        %v2171 = vshrl.u32 %v2170, 7
        %v2172 = vsub.s32 2, %v2171
        %v2173 = vrot.slane %v1755, %v2172
        %v2174 = vlaneseq
        %v2175 = vshrl.u32 %v2174, 7
        %v2176 = vsub.s32 3, %v2175
        %v2177 = vrot.slane %v1755, %v2176
        %v2178 = vlaneseq
        %v2179 = vshrl.u32 %v2178, 7
        %v2180 = vsub.s32 4, %v2179
        %v2181 = vrot.slane %v1755, %v2180
        %v2182 = vlaneseq
        %v2183 = vshrl.u32 %v2182, 7
        %v2184 = vsub.s32 5, %v2183
        %v2185 = vrot.slane %v1755, %v2184
        %v2186 = vlaneseq
        %v2187 = vshrl.u32 %v2186, 7
        %v2188 = vsub.s32 6, %v2187
        %v2189 = vrot.slane %v1755, %v2188
        %v2190 = vlaneseq
        %v2191 = vshrl.u32 %v2190, 7
        %v2192 = vsub.s32 7, %v2191
        %v2193 = vrot.slane %v1755, %v2192
        %v2194 = vlaneseq
        %v2195 = vshrl.u32 %v2194, 7
        %v2196 = vsub.s32 0, %v2195
        %v2197 = vrot.slane %v1757, %v2196
        %v2198 = vlaneseq
        %v2199 = vshrl.u32 %v2198, 7
        %v2200 = vsub.s32 1, %v2199
        %v2201 = vrot.slane %v1757, %v2200
        %v2202 = vlaneseq
        %v2203 = vshrl.u32 %v2202, 7
        %v2204 = vsub.s32 2, %v2203
        %v2205 = vrot.slane %v1757, %v2204
        %v2206 = vlaneseq
        %v2207 = vshrl.u32 %v2206, 7
        %v2208 = vsub.s32 3, %v2207
        %v2209 = vrot.slane %v1757, %v2208
        %v2210 = vlaneseq
        %v2211 = vshrl.u32 %v2210, 7
        %v2212 = vsub.s32 4, %v2211
        %v2213 = vrot.slane %v1757, %v2212
        %v2214 = vlaneseq
        %v2215 = vshrl.u32 %v2214, 7
        %v2216 = vsub.s32 5, %v2215
        %v2217 = vrot.slane %v1757, %v2216
        %v2218 = vlaneseq
        %v2219 = vshrl.u32 %v2218, 7
        %v2220 = vsub.s32 6, %v2219
        %v2221 = vrot.slane %v1757, %v2220
        %v2222 = vlaneseq
        %v2223 = vshrl.u32 %v2222, 7
        %v2224 = vsub.s32 7, %v2223
        %v2225 = vrot.slane %v1757, %v2224
        %v2226 = vlaneseq
        %v2227 = vshrl.u32 %v2226, 7
        %v2228 = vsub.s32 0, %v2227
        %v2229 = vrot.slane %v1759, %v2228
        %v2230 = vlaneseq
        %v2231 = vshrl.u32 %v2230, 7
        %v2232 = vsub.s32 1, %v2231
        %v2233 = vrot.slane %v1759, %v2232
        %v2234 = vlaneseq
        %v2235 = vshrl.u32 %v2234, 7
        %v2236 = vsub.s32 2, %v2235
        %v2237 = vrot.slane %v1759, %v2236
        %v2238 = vlaneseq
        %v2239 = vshrl.u32 %v2238, 7
        %v2240 = vsub.s32 3, %v2239
        %v2241 = vrot.slane %v1759, %v2240
        %v2242 = vlaneseq
        %v2243 = vshrl.u32 %v2242, 7
        %v2244 = vsub.s32 4, %v2243
        %v2245 = vrot.slane %v1759, %v2244
        %v2246 = vlaneseq
        %v2247 = vshrl.u32 %v2246, 7
        %v2248 = vsub.s32 5, %v2247
        %v2249 = vrot.slane %v1759, %v2248
        %v2250 = vlaneseq
        %v2251 = vshrl.u32 %v2250, 7
        %v2252 = vsub.s32 6, %v2251
        %v2253 = vrot.slane %v1759, %v2252
        %v2254 = vlaneseq
        %v2255 = vshrl.u32 %v2254, 7
        %v2256 = vsub.s32 7, %v2255
        %v2257 = vrot.slane %v1759, %v2256
        %v2258 = vlaneseq
        %v2259 = vshrl.u32 %v2258, 7
        %v2260 = vsub.s32 0, %v2259
        %v2261 = vrot.slane %v1761, %v2260
        %v2262 = vlaneseq
        %v2263 = vshrl.u32 %v2262, 7
        %v2264 = vsub.s32 1, %v2263
        %v2265 = vrot.slane %v1761, %v2264
        %v2266 = vlaneseq
        %v2267 = vshrl.u32 %v2266, 7
        %v2268 = vsub.s32 2, %v2267
        %v2269 = vrot.slane %v1761, %v2268
        %v2270 = vlaneseq
        %v2271 = vshrl.u32 %v2270, 7
        %v2272 = vsub.s32 3, %v2271
        %v2273 = vrot.slane %v1761, %v2272
        %v2274 = vlaneseq
        %v2275 = vshrl.u32 %v2274, 7
        %v2276 = vsub.s32 4, %v2275
        %v2277 = vrot.slane %v1761, %v2276
        %v2278 = vlaneseq
        %v2279 = vshrl.u32 %v2278, 7
        %v2280 = vsub.s32 5, %v2279
        %v2281 = vrot.slane %v1761, %v2280
        %v2282 = vlaneseq
        %v2283 = vshrl.u32 %v2282, 7
        %v2284 = vsub.s32 6, %v2283
        %v2285 = vrot.slane %v1761, %v2284
        %v2286 = vlaneseq
        %v2287 = vshrl.u32 %v2286, 7
        %v2288 = vsub.s32 7, %v2287
        %v2289 = vrot.slane %v1761, %v2288
        %v2290 = vcombine.low %v1781, %v1785
        %v2291 = vcombine.low %v1789, %v1793
        %v2292 = vcombine.low %v1797, %v1801
        %v2293 = vcombine.low %v1805, %v1809
        %v2295 = vunpack.c.l.s4 1966171168
        %v2296 = vunpack.c.0.s8 %v2295
        %v2297 = vlaneseq
        %v2298 = vshrl.u32 %v2297, 7
        %v2299 = vsub.s32 %v2296, %v2298
        %v2300 = vrot.slane %v2290, %v2299
        %v2302 = vunpack.c.l.s4 1966171168
        %v2303 = vunpack.c.0.s8 %v2302
        %v2304 = vlaneseq
        %v2305 = vshrl.u32 %v2304, 7
        %v2306 = vsub.s32 %v2303, %v2305
        %v2307 = vrot.slane %v2291, %v2306
        %v2309 = vunpack.c.l.s4 1966171168
        %v2310 = vunpack.c.0.s8 %v2309
        %v2311 = vlaneseq
        %v2312 = vshrl.u32 %v2311, 7
        %v2313 = vsub.s32 %v2310, %v2312
        %v2314 = vrot.slane %v2292, %v2313
        %v2316 = vunpack.c.l.s4 1966171168
        %v2317 = vunpack.c.0.s8 %v2316
        %v2318 = vlaneseq
        %v2319 = vshrl.u32 %v2318, 7
        %v2320 = vsub.s32 %v2317, %v2319
        %v2321 = vrot.slane %v2293, %v2320
        %v2322 = vcombine.low %v2300, %v2307
        %v2323 = vcombine.low %v2314, %v2321
        %v2325 = vunpack.c.l.s4 1966171168
        %v2326 = vunpack.c.0.s8 %v2325
        %v2327 = vlaneseq
        %v2328 = vshrl.u32 %v2327, 7
        %v2329 = vsub.s32 %v2326, %v2328
        %v2330 = vrot.slane %v2322, %v2329
        %v2332 = vunpack.c.l.s4 1966171168
        %v2333 = vunpack.c.0.s8 %v2332
        %v2334 = vlaneseq
        %v2335 = vshrl.u32 %v2334, 7
        %v2336 = vsub.s32 %v2333, %v2335
        %v2337 = vrot.slane %v2323, %v2336
        %v2338 = vcombine.low %v2330, %v2337
        %v2339 = vcombine.low %v1813, %v1817
        %v2340 = vcombine.low %v1821, %v1825
        %v2341 = vcombine.low %v1829, %v1833
        %v2342 = vcombine.low %v1837, %v1841
        %v2344 = vunpack.c.l.s4 1966171168
        %v2345 = vunpack.c.0.s8 %v2344
        %v2346 = vlaneseq
        %v2347 = vshrl.u32 %v2346, 7
        %v2348 = vsub.s32 %v2345, %v2347
        %v2349 = vrot.slane %v2339, %v2348
        %v2351 = vunpack.c.l.s4 1966171168
        %v2352 = vunpack.c.0.s8 %v2351
        %v2353 = vlaneseq
        %v2354 = vshrl.u32 %v2353, 7
        %v2355 = vsub.s32 %v2352, %v2354
        %v2356 = vrot.slane %v2340, %v2355
        %v2358 = vunpack.c.l.s4 1966171168
        %v2359 = vunpack.c.0.s8 %v2358
        %v2360 = vlaneseq
        %v2361 = vshrl.u32 %v2360, 7
        %v2362 = vsub.s32 %v2359, %v2361
        %v2363 = vrot.slane %v2341, %v2362
        %v2365 = vunpack.c.l.s4 1966171168
        %v2366 = vunpack.c.0.s8 %v2365
        %v2367 = vlaneseq
        %v2368 = vshrl.u32 %v2367, 7
        %v2369 = vsub.s32 %v2366, %v2368
        %v2370 = vrot.slane %v2342, %v2369
        %v2371 = vcombine.low %v2349, %v2356
        %v2372 = vcombine.low %v2363, %v2370
        %v2374 = vunpack.c.l.s4 1966171168
        %v2375 = vunpack.c.0.s8 %v2374
        %v2376 = vlaneseq
        %v2377 = vshrl.u32 %v2376, 7
        %v2378 = vsub.s32 %v2375, %v2377
        %v2379 = vrot.slane %v2371, %v2378
        %v2381 = vunpack.c.l.s4 1966171168
        %v2382 = vunpack.c.0.s8 %v2381
        %v2383 = vlaneseq
        %v2384 = vshrl.u32 %v2383, 7
        %v2385 = vsub.s32 %v2382, %v2384
        %v2386 = vrot.slane %v2372, %v2385
        %v2387 = vcombine.low %v2379, %v2386
        %v2388 = vcombine.low %v1845, %v1849
        %v2389 = vcombine.low %v1853, %v1857
        %v2390 = vcombine.low %v1861, %v1865
        %v2391 = vcombine.low %v1869, %v1873
        %v2393 = vunpack.c.l.s4 1966171168
        %v2394 = vunpack.c.0.s8 %v2393
        %v2395 = vlaneseq
        %v2396 = vshrl.u32 %v2395, 7
        %v2397 = vsub.s32 %v2394, %v2396
        %v2398 = vrot.slane %v2388, %v2397
        %v2400 = vunpack.c.l.s4 1966171168
        %v2401 = vunpack.c.0.s8 %v2400
        %v2402 = vlaneseq
        %v2403 = vshrl.u32 %v2402, 7
        %v2404 = vsub.s32 %v2401, %v2403
        %v2405 = vrot.slane %v2389, %v2404
        %v2407 = vunpack.c.l.s4 1966171168
        %v2408 = vunpack.c.0.s8 %v2407
        %v2409 = vlaneseq
        %v2410 = vshrl.u32 %v2409, 7
        %v2411 = vsub.s32 %v2408, %v2410
        %v2412 = vrot.slane %v2390, %v2411
        %v2414 = vunpack.c.l.s4 1966171168
        %v2415 = vunpack.c.0.s8 %v2414
        %v2416 = vlaneseq
        %v2417 = vshrl.u32 %v2416, 7
        %v2418 = vsub.s32 %v2415, %v2417
        %v2419 = vrot.slane %v2391, %v2418
        %v2420 = vcombine.low %v2398, %v2405
        %v2421 = vcombine.low %v2412, %v2419
        %v2423 = vunpack.c.l.s4 1966171168
        %v2424 = vunpack.c.0.s8 %v2423
        %v2425 = vlaneseq
        %v2426 = vshrl.u32 %v2425, 7
        %v2427 = vsub.s32 %v2424, %v2426
        %v2428 = vrot.slane %v2420, %v2427
        %v2430 = vunpack.c.l.s4 1966171168
        %v2431 = vunpack.c.0.s8 %v2430
        %v2432 = vlaneseq
        %v2433 = vshrl.u32 %v2432, 7
        %v2434 = vsub.s32 %v2431, %v2433
        %v2435 = vrot.slane %v2421, %v2434
        %v2436 = vcombine.low %v2428, %v2435
        %v2437 = vcombine.low %v1877, %v1881
        %v2438 = vcombine.low %v1885, %v1889
        %v2439 = vcombine.low %v1893, %v1897
        %v2440 = vcombine.low %v1901, %v1905
        %v2442 = vunpack.c.l.s4 1966171168
        %v2443 = vunpack.c.0.s8 %v2442
        %v2444 = vlaneseq
        %v2445 = vshrl.u32 %v2444, 7
        %v2446 = vsub.s32 %v2443, %v2445
        %v2447 = vrot.slane %v2437, %v2446
        %v2449 = vunpack.c.l.s4 1966171168
        %v2450 = vunpack.c.0.s8 %v2449
        %v2451 = vlaneseq
        %v2452 = vshrl.u32 %v2451, 7
        %v2453 = vsub.s32 %v2450, %v2452
        %v2454 = vrot.slane %v2438, %v2453
        %v2456 = vunpack.c.l.s4 1966171168
        %v2457 = vunpack.c.0.s8 %v2456
        %v2458 = vlaneseq
        %v2459 = vshrl.u32 %v2458, 7
        %v2460 = vsub.s32 %v2457, %v2459
        %v2461 = vrot.slane %v2439, %v2460
        %v2463 = vunpack.c.l.s4 1966171168
        %v2464 = vunpack.c.0.s8 %v2463
        %v2465 = vlaneseq
        %v2466 = vshrl.u32 %v2465, 7
        %v2467 = vsub.s32 %v2464, %v2466
        %v2468 = vrot.slane %v2440, %v2467
        %v2469 = vcombine.low %v2447, %v2454
        %v2470 = vcombine.low %v2461, %v2468
        %v2472 = vunpack.c.l.s4 1966171168
        %v2473 = vunpack.c.0.s8 %v2472
        %v2474 = vlaneseq
        %v2475 = vshrl.u32 %v2474, 7
        %v2476 = vsub.s32 %v2473, %v2475
        %v2477 = vrot.slane %v2469, %v2476
        %v2479 = vunpack.c.l.s4 1966171168
        %v2480 = vunpack.c.0.s8 %v2479
        %v2481 = vlaneseq
        %v2482 = vshrl.u32 %v2481, 7
        %v2483 = vsub.s32 %v2480, %v2482
        %v2484 = vrot.slane %v2470, %v2483
        %v2485 = vcombine.low %v2477, %v2484
        %v2486 = vcombine.low %v1909, %v1913
        %v2487 = vcombine.low %v1917, %v1921
        %v2488 = vcombine.low %v1925, %v1929
        %v2489 = vcombine.low %v1933, %v1937
        %v2491 = vunpack.c.l.s4 1966171168
        %v2492 = vunpack.c.0.s8 %v2491
        %v2493 = vlaneseq
        %v2494 = vshrl.u32 %v2493, 7
        %v2495 = vsub.s32 %v2492, %v2494
        %v2496 = vrot.slane %v2486, %v2495
        %v2498 = vunpack.c.l.s4 1966171168
        %v2499 = vunpack.c.0.s8 %v2498
        %v2500 = vlaneseq
        %v2501 = vshrl.u32 %v2500, 7
        %v2502 = vsub.s32 %v2499, %v2501
        %v2503 = vrot.slane %v2487, %v2502
        %v2505 = vunpack.c.l.s4 1966171168
        %v2506 = vunpack.c.0.s8 %v2505
        %v2507 = vlaneseq
        %v2508 = vshrl.u32 %v2507, 7
        %v2509 = vsub.s32 %v2506, %v2508
        %v2510 = vrot.slane %v2488, %v2509
        %v2512 = vunpack.c.l.s4 1966171168
        %v2513 = vunpack.c.0.s8 %v2512
        %v2514 = vlaneseq
        %v2515 = vshrl.u32 %v2514, 7
        %v2516 = vsub.s32 %v2513, %v2515
        %v2517 = vrot.slane %v2489, %v2516
        %v2518 = vcombine.low %v2496, %v2503
        %v2519 = vcombine.low %v2510, %v2517
        %v2521 = vunpack.c.l.s4 1966171168
        %v2522 = vunpack.c.0.s8 %v2521
        %v2523 = vlaneseq
        %v2524 = vshrl.u32 %v2523, 7
        %v2525 = vsub.s32 %v2522, %v2524
        %v2526 = vrot.slane %v2518, %v2525
        %v2528 = vunpack.c.l.s4 1966171168
        %v2529 = vunpack.c.0.s8 %v2528
        %v2530 = vlaneseq
        %v2531 = vshrl.u32 %v2530, 7
        %v2532 = vsub.s32 %v2529, %v2531
        %v2533 = vrot.slane %v2519, %v2532
        %v2534 = vcombine.low %v2526, %v2533
        %v2535 = vcombine.low %v1941, %v1945
        %v2536 = vcombine.low %v1949, %v1953
        %v2537 = vcombine.low %v1957, %v1961
        %v2538 = vcombine.low %v1965, %v1969
        %v2540 = vunpack.c.l.s4 1966171168
        %v2541 = vunpack.c.0.s8 %v2540
        %v2542 = vlaneseq
        %v2543 = vshrl.u32 %v2542, 7
        %v2544 = vsub.s32 %v2541, %v2543
        %v2545 = vrot.slane %v2535, %v2544
        %v2547 = vunpack.c.l.s4 1966171168
        %v2548 = vunpack.c.0.s8 %v2547
        %v2549 = vlaneseq
        %v2550 = vshrl.u32 %v2549, 7
        %v2551 = vsub.s32 %v2548, %v2550
        %v2552 = vrot.slane %v2536, %v2551
        %v2554 = vunpack.c.l.s4 1966171168
        %v2555 = vunpack.c.0.s8 %v2554
        %v2556 = vlaneseq
        %v2557 = vshrl.u32 %v2556, 7
        %v2558 = vsub.s32 %v2555, %v2557
        %v2559 = vrot.slane %v2537, %v2558
        %v2561 = vunpack.c.l.s4 1966171168
        %v2562 = vunpack.c.0.s8 %v2561
        %v2563 = vlaneseq
        %v2564 = vshrl.u32 %v2563, 7
        %v2565 = vsub.s32 %v2562, %v2564
        %v2566 = vrot.slane %v2538, %v2565
        %v2567 = vcombine.low %v2545, %v2552
        %v2568 = vcombine.low %v2559, %v2566
        %v2570 = vunpack.c.l.s4 1966171168
        %v2571 = vunpack.c.0.s8 %v2570
        %v2572 = vlaneseq
        %v2573 = vshrl.u32 %v2572, 7
        %v2574 = vsub.s32 %v2571, %v2573
        %v2575 = vrot.slane %v2567, %v2574
        %v2577 = vunpack.c.l.s4 1966171168
        %v2578 = vunpack.c.0.s8 %v2577
        %v2579 = vlaneseq
        %v2580 = vshrl.u32 %v2579, 7
        %v2581 = vsub.s32 %v2578, %v2580
        %v2582 = vrot.slane %v2568, %v2581
        %v2583 = vcombine.low %v2575, %v2582
        %v2584 = vcombine.low %v1973, %v1977
        %v2585 = vcombine.low %v1981, %v1985
        %v2586 = vcombine.low %v1989, %v1993
        %v2587 = vcombine.low %v1997, %v2001
        %v2589 = vunpack.c.l.s4 1966171168
        %v2590 = vunpack.c.0.s8 %v2589
        %v2591 = vlaneseq
        %v2592 = vshrl.u32 %v2591, 7
        %v2593 = vsub.s32 %v2590, %v2592
        %v2594 = vrot.slane %v2584, %v2593
        %v2596 = vunpack.c.l.s4 1966171168
        %v2597 = vunpack.c.0.s8 %v2596
        %v2598 = vlaneseq
        %v2599 = vshrl.u32 %v2598, 7
        %v2600 = vsub.s32 %v2597, %v2599
        %v2601 = vrot.slane %v2585, %v2600
        %v2603 = vunpack.c.l.s4 1966171168
        %v2604 = vunpack.c.0.s8 %v2603
        %v2605 = vlaneseq
        %v2606 = vshrl.u32 %v2605, 7
        %v2607 = vsub.s32 %v2604, %v2606
        %v2608 = vrot.slane %v2586, %v2607
        %v2610 = vunpack.c.l.s4 1966171168
        %v2611 = vunpack.c.0.s8 %v2610
        %v2612 = vlaneseq
        %v2613 = vshrl.u32 %v2612, 7
        %v2614 = vsub.s32 %v2611, %v2613
        %v2615 = vrot.slane %v2587, %v2614
        %v2616 = vcombine.low %v2594, %v2601
        %v2617 = vcombine.low %v2608, %v2615
        %v2619 = vunpack.c.l.s4 1966171168
        %v2620 = vunpack.c.0.s8 %v2619
        %v2621 = vlaneseq
        %v2622 = vshrl.u32 %v2621, 7
        %v2623 = vsub.s32 %v2620, %v2622
        %v2624 = vrot.slane %v2616, %v2623
        %v2626 = vunpack.c.l.s4 1966171168
        %v2627 = vunpack.c.0.s8 %v2626
        %v2628 = vlaneseq
        %v2629 = vshrl.u32 %v2628, 7
        %v2630 = vsub.s32 %v2627, %v2629
        %v2631 = vrot.slane %v2617, %v2630
        %v2632 = vcombine.low %v2624, %v2631
        %v2633 = vcombine.low %v2005, %v2009
        %v2634 = vcombine.low %v2013, %v2017
        %v2635 = vcombine.low %v2021, %v2025
        %v2636 = vcombine.low %v2029, %v2033
        %v2638 = vunpack.c.l.s4 1966171168
        %v2639 = vunpack.c.0.s8 %v2638
        %v2640 = vlaneseq
        %v2641 = vshrl.u32 %v2640, 7
        %v2642 = vsub.s32 %v2639, %v2641
        %v2643 = vrot.slane %v2633, %v2642
        %v2645 = vunpack.c.l.s4 1966171168
        %v2646 = vunpack.c.0.s8 %v2645
        %v2647 = vlaneseq
        %v2648 = vshrl.u32 %v2647, 7
        %v2649 = vsub.s32 %v2646, %v2648
        %v2650 = vrot.slane %v2634, %v2649
        %v2652 = vunpack.c.l.s4 1966171168
        %v2653 = vunpack.c.0.s8 %v2652
        %v2654 = vlaneseq
        %v2655 = vshrl.u32 %v2654, 7
        %v2656 = vsub.s32 %v2653, %v2655
        %v2657 = vrot.slane %v2635, %v2656
        %v2659 = vunpack.c.l.s4 1966171168
        %v2660 = vunpack.c.0.s8 %v2659
        %v2661 = vlaneseq
        %v2662 = vshrl.u32 %v2661, 7
        %v2663 = vsub.s32 %v2660, %v2662
        %v2664 = vrot.slane %v2636, %v2663
        %v2665 = vcombine.low %v2643, %v2650
        %v2666 = vcombine.low %v2657, %v2664
        %v2668 = vunpack.c.l.s4 1966171168
        %v2669 = vunpack.c.0.s8 %v2668
        %v2670 = vlaneseq
        %v2671 = vshrl.u32 %v2670, 7
        %v2672 = vsub.s32 %v2669, %v2671
        %v2673 = vrot.slane %v2665, %v2672
        %v2675 = vunpack.c.l.s4 1966171168
        %v2676 = vunpack.c.0.s8 %v2675
        %v2677 = vlaneseq
        %v2678 = vshrl.u32 %v2677, 7
        %v2679 = vsub.s32 %v2676, %v2678
        %v2680 = vrot.slane %v2666, %v2679
        %v2681 = vcombine.low %v2673, %v2680
        %v2682 = vcombine.low %v2037, %v2041
        %v2683 = vcombine.low %v2045, %v2049
        %v2684 = vcombine.low %v2053, %v2057
        %v2685 = vcombine.low %v2061, %v2065
        %v2687 = vunpack.c.l.s4 1966171168
        %v2688 = vunpack.c.0.s8 %v2687
        %v2689 = vlaneseq
        %v2690 = vshrl.u32 %v2689, 7
        %v2691 = vsub.s32 %v2688, %v2690
        %v2692 = vrot.slane %v2682, %v2691
        %v2694 = vunpack.c.l.s4 1966171168
        %v2695 = vunpack.c.0.s8 %v2694
        %v2696 = vlaneseq
        %v2697 = vshrl.u32 %v2696, 7
        %v2698 = vsub.s32 %v2695, %v2697
        %v2699 = vrot.slane %v2683, %v2698
        %v2701 = vunpack.c.l.s4 1966171168
        %v2702 = vunpack.c.0.s8 %v2701
        %v2703 = vlaneseq
        %v2704 = vshrl.u32 %v2703, 7
        %v2705 = vsub.s32 %v2702, %v2704
        %v2706 = vrot.slane %v2684, %v2705
        %v2708 = vunpack.c.l.s4 1966171168
        %v2709 = vunpack.c.0.s8 %v2708
        %v2710 = vlaneseq
        %v2711 = vshrl.u32 %v2710, 7
        %v2712 = vsub.s32 %v2709, %v2711
        %v2713 = vrot.slane %v2685, %v2712
        %v2714 = vcombine.low %v2692, %v2699
        %v2715 = vcombine.low %v2706, %v2713
        %v2717 = vunpack.c.l.s4 1966171168
        %v2718 = vunpack.c.0.s8 %v2717
        %v2719 = vlaneseq
        %v2720 = vshrl.u32 %v2719, 7
        %v2721 = vsub.s32 %v2718, %v2720
        %v2722 = vrot.slane %v2714, %v2721
        %v2724 = vunpack.c.l.s4 1966171168
        %v2725 = vunpack.c.0.s8 %v2724
        %v2726 = vlaneseq
        %v2727 = vshrl.u32 %v2726, 7
        %v2728 = vsub.s32 %v2725, %v2727
        %v2729 = vrot.slane %v2715, %v2728
        %v2730 = vcombine.low %v2722, %v2729
        %v2731 = vcombine.low %v2069, %v2073
        %v2732 = vcombine.low %v2077, %v2081
        %v2733 = vcombine.low %v2085, %v2089
        %v2734 = vcombine.low %v2093, %v2097
        %v2736 = vunpack.c.l.s4 1966171168
        %v2737 = vunpack.c.0.s8 %v2736
        %v2738 = vlaneseq
        %v2739 = vshrl.u32 %v2738, 7
        %v2740 = vsub.s32 %v2737, %v2739
        %v2741 = vrot.slane %v2731, %v2740
        %v2743 = vunpack.c.l.s4 1966171168
        %v2744 = vunpack.c.0.s8 %v2743
        %v2745 = vlaneseq
        %v2746 = vshrl.u32 %v2745, 7
        %v2747 = vsub.s32 %v2744, %v2746
        %v2748 = vrot.slane %v2732, %v2747
        %v2750 = vunpack.c.l.s4 1966171168
        %v2751 = vunpack.c.0.s8 %v2750
        %v2752 = vlaneseq
        %v2753 = vshrl.u32 %v2752, 7
        %v2754 = vsub.s32 %v2751, %v2753
        %v2755 = vrot.slane %v2733, %v2754
        %v2757 = vunpack.c.l.s4 1966171168
        %v2758 = vunpack.c.0.s8 %v2757
        %v2759 = vlaneseq
        %v2760 = vshrl.u32 %v2759, 7
        %v2761 = vsub.s32 %v2758, %v2760
        %v2762 = vrot.slane %v2734, %v2761
        %v2763 = vcombine.low %v2741, %v2748
        %v2764 = vcombine.low %v2755, %v2762
        %v2766 = vunpack.c.l.s4 1966171168
        %v2767 = vunpack.c.0.s8 %v2766
        %v2768 = vlaneseq
        %v2769 = vshrl.u32 %v2768, 7
        %v2770 = vsub.s32 %v2767, %v2769
        %v2771 = vrot.slane %v2763, %v2770
        %v2773 = vunpack.c.l.s4 1966171168
        %v2774 = vunpack.c.0.s8 %v2773
        %v2775 = vlaneseq
        %v2776 = vshrl.u32 %v2775, 7
        %v2777 = vsub.s32 %v2774, %v2776
        %v2778 = vrot.slane %v2764, %v2777
        %v2779 = vcombine.low %v2771, %v2778
        %v2780 = vcombine.low %v2101, %v2105
        %v2781 = vcombine.low %v2109, %v2113
        %v2782 = vcombine.low %v2117, %v2121
        %v2783 = vcombine.low %v2125, %v2129
        %v2785 = vunpack.c.l.s4 1966171168
        %v2786 = vunpack.c.0.s8 %v2785
        %v2787 = vlaneseq
        %v2788 = vshrl.u32 %v2787, 7
        %v2789 = vsub.s32 %v2786, %v2788
        %v2790 = vrot.slane %v2780, %v2789
        %v2792 = vunpack.c.l.s4 1966171168
        %v2793 = vunpack.c.0.s8 %v2792
        %v2794 = vlaneseq
        %v2795 = vshrl.u32 %v2794, 7
        %v2796 = vsub.s32 %v2793, %v2795
        %v2797 = vrot.slane %v2781, %v2796
        %v2799 = vunpack.c.l.s4 1966171168
        %v2800 = vunpack.c.0.s8 %v2799
        %v2801 = vlaneseq
        %v2802 = vshrl.u32 %v2801, 7
        %v2803 = vsub.s32 %v2800, %v2802
        %v2804 = vrot.slane %v2782, %v2803
        %v2806 = vunpack.c.l.s4 1966171168
        %v2807 = vunpack.c.0.s8 %v2806
        %v2808 = vlaneseq
        %v2809 = vshrl.u32 %v2808, 7
        %v2810 = vsub.s32 %v2807, %v2809
        %v2811 = vrot.slane %v2783, %v2810
        %v2812 = vcombine.low %v2790, %v2797
        %v2813 = vcombine.low %v2804, %v2811
        %v2815 = vunpack.c.l.s4 1966171168
        %v2816 = vunpack.c.0.s8 %v2815
        %v2817 = vlaneseq
        %v2818 = vshrl.u32 %v2817, 7
        %v2819 = vsub.s32 %v2816, %v2818
        %v2820 = vrot.slane %v2812, %v2819
        %v2822 = vunpack.c.l.s4 1966171168
        %v2823 = vunpack.c.0.s8 %v2822
        %v2824 = vlaneseq
        %v2825 = vshrl.u32 %v2824, 7
        %v2826 = vsub.s32 %v2823, %v2825
        %v2827 = vrot.slane %v2813, %v2826
        %v2828 = vcombine.low %v2820, %v2827
        %v2829 = vcombine.low %v2133, %v2137
        %v2830 = vcombine.low %v2141, %v2145
        %v2831 = vcombine.low %v2149, %v2153
        %v2832 = vcombine.low %v2157, %v2161
        %v2834 = vunpack.c.l.s4 1966171168
        %v2835 = vunpack.c.0.s8 %v2834
        %v2836 = vlaneseq
        %v2837 = vshrl.u32 %v2836, 7
        %v2838 = vsub.s32 %v2835, %v2837
        %v2839 = vrot.slane %v2829, %v2838
        %v2841 = vunpack.c.l.s4 1966171168
        %v2842 = vunpack.c.0.s8 %v2841
        %v2843 = vlaneseq
        %v2844 = vshrl.u32 %v2843, 7
        %v2845 = vsub.s32 %v2842, %v2844
        %v2846 = vrot.slane %v2830, %v2845
        %v2848 = vunpack.c.l.s4 1966171168
        %v2849 = vunpack.c.0.s8 %v2848
        %v2850 = vlaneseq
        %v2851 = vshrl.u32 %v2850, 7
        %v2852 = vsub.s32 %v2849, %v2851
        %v2853 = vrot.slane %v2831, %v2852
        %v2855 = vunpack.c.l.s4 1966171168
        %v2856 = vunpack.c.0.s8 %v2855
        %v2857 = vlaneseq
        %v2858 = vshrl.u32 %v2857, 7
        %v2859 = vsub.s32 %v2856, %v2858
        %v2860 = vrot.slane %v2832, %v2859
        %v2861 = vcombine.low %v2839, %v2846
        %v2862 = vcombine.low %v2853, %v2860
        %v2864 = vunpack.c.l.s4 1966171168
        %v2865 = vunpack.c.0.s8 %v2864
        %v2866 = vlaneseq
        %v2867 = vshrl.u32 %v2866, 7
        %v2868 = vsub.s32 %v2865, %v2867
        %v2869 = vrot.slane %v2861, %v2868
        %v2871 = vunpack.c.l.s4 1966171168
        %v2872 = vunpack.c.0.s8 %v2871
        %v2873 = vlaneseq
        %v2874 = vshrl.u32 %v2873, 7
        %v2875 = vsub.s32 %v2872, %v2874
        %v2876 = vrot.slane %v2862, %v2875
        %v2877 = vcombine.low %v2869, %v2876
        %v2878 = vcombine.low %v2165, %v2169
        %v2879 = vcombine.low %v2173, %v2177
        %v2880 = vcombine.low %v2181, %v2185
        %v2881 = vcombine.low %v2189, %v2193
        %v2883 = vunpack.c.l.s4 1966171168
        %v2884 = vunpack.c.0.s8 %v2883
        %v2885 = vlaneseq
        %v2886 = vshrl.u32 %v2885, 7
        %v2887 = vsub.s32 %v2884, %v2886
        %v2888 = vrot.slane %v2878, %v2887
        %v2890 = vunpack.c.l.s4 1966171168
        %v2891 = vunpack.c.0.s8 %v2890
        %v2892 = vlaneseq
        %v2893 = vshrl.u32 %v2892, 7
        %v2894 = vsub.s32 %v2891, %v2893
        %v2895 = vrot.slane %v2879, %v2894
        %v2897 = vunpack.c.l.s4 1966171168
        %v2898 = vunpack.c.0.s8 %v2897
        %v2899 = vlaneseq
        %v2900 = vshrl.u32 %v2899, 7
        %v2901 = vsub.s32 %v2898, %v2900
        %v2902 = vrot.slane %v2880, %v2901
        %v2904 = vunpack.c.l.s4 1966171168
        %v2905 = vunpack.c.0.s8 %v2904
        %v2906 = vlaneseq
        %v2907 = vshrl.u32 %v2906, 7
        %v2908 = vsub.s32 %v2905, %v2907
        %v2909 = vrot.slane %v2881, %v2908
        %v2910 = vcombine.low %v2888, %v2895
        %v2911 = vcombine.low %v2902, %v2909
        %v2913 = vunpack.c.l.s4 1966171168
        %v2914 = vunpack.c.0.s8 %v2913
        %v2915 = vlaneseq
        %v2916 = vshrl.u32 %v2915, 7
        %v2917 = vsub.s32 %v2914, %v2916
        %v2918 = vrot.slane %v2910, %v2917
        %v2920 = vunpack.c.l.s4 1966171168
        %v2921 = vunpack.c.0.s8 %v2920
        %v2922 = vlaneseq
        %v2923 = vshrl.u32 %v2922, 7
        %v2924 = vsub.s32 %v2921, %v2923
        %v2925 = vrot.slane %v2911, %v2924
        %v2926 = vcombine.low %v2918, %v2925
        %v2927 = vcombine.low %v2197, %v2201
        %v2928 = vcombine.low %v2205, %v2209
        %v2929 = vcombine.low %v2213, %v2217
        %v2930 = vcombine.low %v2221, %v2225
        %v2932 = vunpack.c.l.s4 1966171168
        %v2933 = vunpack.c.0.s8 %v2932
        %v2934 = vlaneseq
        %v2935 = vshrl.u32 %v2934, 7
        %v2936 = vsub.s32 %v2933, %v2935
        %v2937 = vrot.slane %v2927, %v2936
        %v2939 = vunpack.c.l.s4 1966171168
        %v2940 = vunpack.c.0.s8 %v2939
        %v2941 = vlaneseq
        %v2942 = vshrl.u32 %v2941, 7
        %v2943 = vsub.s32 %v2940, %v2942
        %v2944 = vrot.slane %v2928, %v2943
        %v2946 = vunpack.c.l.s4 1966171168
        %v2947 = vunpack.c.0.s8 %v2946
        %v2948 = vlaneseq
        %v2949 = vshrl.u32 %v2948, 7
        %v2950 = vsub.s32 %v2947, %v2949
        %v2951 = vrot.slane %v2929, %v2950
        %v2953 = vunpack.c.l.s4 1966171168
        %v2954 = vunpack.c.0.s8 %v2953
        %v2955 = vlaneseq
        %v2956 = vshrl.u32 %v2955, 7
        %v2957 = vsub.s32 %v2954, %v2956
        %v2958 = vrot.slane %v2930, %v2957
        %v2959 = vcombine.low %v2937, %v2944
        %v2960 = vcombine.low %v2951, %v2958
        %v2962 = vunpack.c.l.s4 1966171168
        %v2963 = vunpack.c.0.s8 %v2962
        %v2964 = vlaneseq
        %v2965 = vshrl.u32 %v2964, 7
        %v2966 = vsub.s32 %v2963, %v2965
        %v2967 = vrot.slane %v2959, %v2966
        %v2969 = vunpack.c.l.s4 1966171168
        %v2970 = vunpack.c.0.s8 %v2969
        %v2971 = vlaneseq
        %v2972 = vshrl.u32 %v2971, 7
        %v2973 = vsub.s32 %v2970, %v2972
        %v2974 = vrot.slane %v2960, %v2973
        %v2975 = vcombine.low %v2967, %v2974
        %v2976 = vcombine.low %v2229, %v2233
        %v2977 = vcombine.low %v2237, %v2241
        %v2978 = vcombine.low %v2245, %v2249
        %v2979 = vcombine.low %v2253, %v2257
        %v2981 = vunpack.c.l.s4 1966171168
        %v2982 = vunpack.c.0.s8 %v2981
        %v2983 = vlaneseq
        %v2984 = vshrl.u32 %v2983, 7
        %v2985 = vsub.s32 %v2982, %v2984
        %v2986 = vrot.slane %v2976, %v2985
        %v2988 = vunpack.c.l.s4 1966171168
        %v2989 = vunpack.c.0.s8 %v2988
        %v2990 = vlaneseq
        %v2991 = vshrl.u32 %v2990, 7
        %v2992 = vsub.s32 %v2989, %v2991
        %v2993 = vrot.slane %v2977, %v2992
        %v2995 = vunpack.c.l.s4 1966171168
        %v2996 = vunpack.c.0.s8 %v2995
        %v2997 = vlaneseq
        %v2998 = vshrl.u32 %v2997, 7
        %v2999 = vsub.s32 %v2996, %v2998
        %v3000 = vrot.slane %v2978, %v2999
        %v3002 = vunpack.c.l.s4 1966171168
        %v3003 = vunpack.c.0.s8 %v3002
        %v3004 = vlaneseq
        %v3005 = vshrl.u32 %v3004, 7
        %v3006 = vsub.s32 %v3003, %v3005
        %v3007 = vrot.slane %v2979, %v3006
        %v3008 = vcombine.low %v2986, %v2993
        %v3009 = vcombine.low %v3000, %v3007
        %v3011 = vunpack.c.l.s4 1966171168
        %v3012 = vunpack.c.0.s8 %v3011
        %v3013 = vlaneseq
        %v3014 = vshrl.u32 %v3013, 7
        %v3015 = vsub.s32 %v3012, %v3014
        %v3016 = vrot.slane %v3008, %v3015
        %v3018 = vunpack.c.l.s4 1966171168
        %v3019 = vunpack.c.0.s8 %v3018
        %v3020 = vlaneseq
        %v3021 = vshrl.u32 %v3020, 7
        %v3022 = vsub.s32 %v3019, %v3021
        %v3023 = vrot.slane %v3009, %v3022
        %v3024 = vcombine.low %v3016, %v3023
        %v3025 = vcombine.low %v2261, %v2265
        %v3026 = vcombine.low %v2269, %v2273
        %v3027 = vcombine.low %v2277, %v2281
        %v3028 = vcombine.low %v2285, %v2289
        %v3030 = vunpack.c.l.s4 1966171168
        %v3031 = vunpack.c.0.s8 %v3030
        %v3032 = vlaneseq
        %v3033 = vshrl.u32 %v3032, 7
        %v3034 = vsub.s32 %v3031, %v3033
        %v3035 = vrot.slane %v3025, %v3034
        %v3037 = vunpack.c.l.s4 1966171168
        %v3038 = vunpack.c.0.s8 %v3037
        %v3039 = vlaneseq
        %v3040 = vshrl.u32 %v3039, 7
        %v3041 = vsub.s32 %v3038, %v3040
        %v3042 = vrot.slane %v3026, %v3041
        %v3044 = vunpack.c.l.s4 1966171168
        %v3045 = vunpack.c.0.s8 %v3044
        %v3046 = vlaneseq
        %v3047 = vshrl.u32 %v3046, 7
        %v3048 = vsub.s32 %v3045, %v3047
        %v3049 = vrot.slane %v3027, %v3048
        %v3051 = vunpack.c.l.s4 1966171168
        %v3052 = vunpack.c.0.s8 %v3051
        %v3053 = vlaneseq
        %v3054 = vshrl.u32 %v3053, 7
        %v3055 = vsub.s32 %v3052, %v3054
        %v3056 = vrot.slane %v3028, %v3055
        %v3057 = vcombine.low %v3035, %v3042
        %v3058 = vcombine.low %v3049, %v3056
        %v3060 = vunpack.c.l.s4 1966171168
        %v3061 = vunpack.c.0.s8 %v3060
        %v3062 = vlaneseq
        %v3063 = vshrl.u32 %v3062, 7
        %v3064 = vsub.s32 %v3061, %v3063
        %v3065 = vrot.slane %v3057, %v3064
        %v3067 = vunpack.c.l.s4 1966171168
        %v3068 = vunpack.c.0.s8 %v3067
        %v3069 = vlaneseq
        %v3070 = vshrl.u32 %v3069, 7
        %v3071 = vsub.s32 %v3068, %v3070
        %v3072 = vrot.slane %v3058, %v3071
        %v3073 = vcombine.low %v3065, %v3072
        %3074 = vset.pattern.permute.xlu0 0
        %3075 = vperm.xlu0 %3074, %v2338
        %v3076 = vpop.permute.xlu0 %3075
        %3077 = vset.pattern.permute.xlu0 0
        %3078 = vperm.xlu0 %3077, %v2387
        %v3079 = vpop.permute.xlu0 %3078
        %3080 = vset.pattern.permute.xlu0 0
        %3081 = vperm.xlu0 %3080, %v2436
        %v3082 = vpop.permute.xlu0 %3081
        %3083 = vset.pattern.permute.xlu0 0
        %3084 = vperm.xlu0 %3083, %v2485
        %v3085 = vpop.permute.xlu0 %3084
        %3086 = vset.pattern.permute.xlu0 0
        %3087 = vperm.xlu0 %3086, %v2534
        %v3088 = vpop.permute.xlu0 %3087
        %3089 = vset.pattern.permute.xlu0 0
        %3090 = vperm.xlu0 %3089, %v2583
        %v3091 = vpop.permute.xlu0 %3090
        %3092 = vset.pattern.permute.xlu0 0
        %3093 = vperm.xlu0 %3092, %v2632
        %v3094 = vpop.permute.xlu0 %3093
        %3095 = vset.pattern.permute.xlu0 0
        %3096 = vperm.xlu0 %3095, %v2681
        %v3097 = vpop.permute.xlu0 %3096
        %3098 = vset.pattern.permute.xlu0 0
        %3099 = vperm.xlu0 %3098, %v2730
        %v3100 = vpop.permute.xlu0 %3099
        %3101 = vset.pattern.permute.xlu0 0
        %3102 = vperm.xlu0 %3101, %v2779
        %v3103 = vpop.permute.xlu0 %3102
        %3104 = vset.pattern.permute.xlu0 0
        %3105 = vperm.xlu0 %3104, %v2828
        %v3106 = vpop.permute.xlu0 %3105
        %3107 = vset.pattern.permute.xlu0 0
        %3108 = vperm.xlu0 %3107, %v2877
        %v3109 = vpop.permute.xlu0 %3108
        %3110 = vset.pattern.permute.xlu0 0
        %3111 = vperm.xlu0 %3110, %v2926
        %v3112 = vpop.permute.xlu0 %3111
        %3113 = vset.pattern.permute.xlu0 0
        %3114 = vperm.xlu0 %3113, %v2975
        %v3115 = vpop.permute.xlu0 %3114
        %3116 = vset.pattern.permute.xlu0 0
        %3117 = vperm.xlu0 %3116, %v3024
        %v3118 = vpop.permute.xlu0 %3117
        %3119 = vset.pattern.permute.xlu0 0
        %3120 = vperm.xlu0 %3119, %v3073
        %v3121 = vpop.permute.xlu0 %3120
        %v3122 = vlaneseq
        %v3123 = vshrl.u32 %v3122, 7
        %v3124 = vsub.s32 %v1602, %v3123
        %v3125 = vrot.slane %v3076, %v3124
        %v3126 = vlaneseq
        %v3127 = vshrl.u32 %v3126, 7
        %v3128 = vsub.s32 %v1607, %v3127
        %v3129 = vrot.slane %v3079, %v3128
        %v3130 = vsel %vm1612, %v3129, %v3125
        %v3131 = vlaneseq
        %v3132 = vshrl.u32 %v3131, 7
        %v3133 = vsub.s32 %v1614, %v3132
        %v3134 = vrot.slane %v3082, %v3133
        %v3135 = vsel %vm1619, %v3134, %v3130
        %v3136 = vlaneseq
        %v3137 = vshrl.u32 %v3136, 7
        %v3138 = vsub.s32 %v1621, %v3137
        %v3139 = vrot.slane %v3085, %v3138
        %v3140 = vsel %vm1626, %v3139, %v3135
        %v3141 = vlaneseq
        %v3142 = vshrl.u32 %v3141, 7
        %v3143 = vsub.s32 %v1628, %v3142
        %v3144 = vrot.slane %v3088, %v3143
        %v3145 = vsel %vm1633, %v3144, %v3140
        %v3146 = vlaneseq
        %v3147 = vshrl.u32 %v3146, 7
        %v3148 = vsub.s32 %v1635, %v3147
        %v3149 = vrot.slane %v3091, %v3148
        %v3150 = vsel %vm1640, %v3149, %v3145
        %v3151 = vlaneseq
        %v3152 = vshrl.u32 %v3151, 7
        %v3153 = vsub.s32 %v1642, %v3152
        %v3154 = vrot.slane %v3094, %v3153
        %v3155 = vsel %vm1647, %v3154, %v3150
        %v3156 = vlaneseq
        %v3157 = vshrl.u32 %v3156, 7
        %v3158 = vsub.s32 %v1649, %v3157
        %v3159 = vrot.slane %v3097, %v3158
        %v3160 = vsel %vm1654, %v3159, %v3155
        %v3161 = vlaneseq
        %v3162 = vshrl.u32 %v3161, 7
        %v3163 = vsub.s32 %v1656, %v3162
        %v3164 = vrot.slane %v3100, %v3163
        %v3165 = vsel %vm1661, %v3164, %v3160
        %v3166 = vlaneseq
        %v3167 = vshrl.u32 %v3166, 7
        %v3168 = vsub.s32 %v1663, %v3167
        %v3169 = vrot.slane %v3103, %v3168
        %v3170 = vsel %vm1668, %v3169, %v3165
        %v3171 = vlaneseq
        %v3172 = vshrl.u32 %v3171, 7
        %v3173 = vsub.s32 %v1670, %v3172
        %v3174 = vrot.slane %v3106, %v3173
        %v3175 = vsel %vm1675, %v3174, %v3170
        %v3176 = vlaneseq
        %v3177 = vshrl.u32 %v3176, 7
        %v3178 = vsub.s32 %v1677, %v3177
        %v3179 = vrot.slane %v3109, %v3178
        %v3180 = vsel %vm1682, %v3179, %v3175
        %v3181 = vlaneseq
        %v3182 = vshrl.u32 %v3181, 7
        %v3183 = vsub.s32 %v1684, %v3182
        %v3184 = vrot.slane %v3112, %v3183
        %v3185 = vsel %vm1689, %v3184, %v3180
        %v3186 = vlaneseq
        %v3187 = vshrl.u32 %v3186, 7
        %v3188 = vsub.s32 %v1691, %v3187
        %v3189 = vrot.slane %v3115, %v3188
        %v3190 = vsel %vm1696, %v3189, %v3185
        %v3191 = vlaneseq
        %v3192 = vshrl.u32 %v3191, 7
        %v3193 = vsub.s32 %v1698, %v3192
        %v3194 = vrot.slane %v3118, %v3193
        %v3195 = vsel %vm1703, %v3194, %v3190
        %v3196 = vlaneseq
        %v3197 = vshrl.u32 %v3196, 7
        %v3198 = vsub.s32 %v1705, %v3197
        %v3199 = vrot.slane %v3121, %v3198
        %v3200 = vsel %vm1710, %v3199, %v3195
        %v3202 = vunpack.c.l.s4 1966171168
        %v3203 = vunpack.c.0.s8 %v3202
        %v3204 = vlaneseq
        %v3205 = vshrl.u32 %v3204, 7
        %v3206 = vsub.s32 %v3203, %v3205
        %v3207 = vrot.slane %v3200, %v3206
        %v3209 = vunpack.c.l.s4 1966171168
        %v3210 = vunpack.c.0.s8 %v3209
        %v3211 = vlaneseq
        %v3212 = vshrl.u32 %v3211, 7
        %v3213 = vsub.s32 %v3210, %v3212
        %v3214 = vrot.slane %v3207, %v3213
        %v3216 = vmax.f32 %v1729, %v3214
        %3217 = vst [vmem:[%s185] sm:$0x1] %v3216
        // Predicated region
        $region33: #{tpu_custom_call.1} parent=23 // pred_check
          %p3218 = pneg %p186
        $region34: #{tpu_custom_call.1} parent=23 // pred_check_branch
          %3220 = sbr.rel (%p3218) target = $region36
        $region35: #{tpu_custom_call.1} parent=23 // pred_region
          %v3221 = vld [vmem:[%s179] sm:$0x1]
          %v3222 = vmul.f32 %v3221, 0.0078125
          %3223 = vst [vmem:[%s179] sm:$0x1] %v3222
        $region36: #{tpu_custom_call.1} parent=23 // pred_fallthru
          _
        %s3224 = sand.u32 %s71, 1
        %s3225 = scalar_lea.sflag [#allocation4], %s3224
        %s3226 = sand.u32 %s71, 1
        %s3227 = scalar_lea.vmem [#allocation5], %s3226
        %s3228 = sand.u32 %s97, 1
        %s3229 = scalar_lea.sflag [#allocation7], %s3228
        %s3230 = sand.u32 %s97, 1
        %s3231 = scalar_lea.vmem [#allocation6], %s3230
        // Predicated region
        $region37: #{tpu_custom_call.1} parent=23 // pred_check
          %p3232 = pneg %p81
        $region38: #{tpu_custom_call.1} parent=23 // pred_check_branch
          %3234 = sbr.rel (%p3232) target = $region40
        $region39: #{tpu_custom_call.1} parent=23 // pred_region
          %s3236 = ssub.s32 16, 16
          %3237 = vsyncadd %s3225, %s3236
          %s3238 = smul.addr %s27, 16
          %s3239 = scalar_lea.hbm %s1, %s3238
          %s3241 = sshll.u32 %s3227, 4
          %s3242 = int_to_ptr.vmem [resolvable:$true] %s3241
          %3244 = dma.vmem_to_hbm [thread:$0]  %s3242, 16, %s3239, %s3225
        $region40: #{tpu_custom_call.1} parent=23 // pred_fallthru
          _
        // Predicated region
        $region41: #{tpu_custom_call.1} parent=23 // pred_check
          %p3245 = pneg %p107
        $region42: #{tpu_custom_call.1} parent=23 // pred_check_branch
          %3247 = sbr.rel (%p3245) target = $region44
        $region43: #{tpu_custom_call.1} parent=23 // pred_region
          %s3249 = ssub.s32 16, 16
          %3250 = vsyncadd %s3229, %s3249
          %s3251 = smul.addr %s27, 16
          %s3252 = scalar_lea.hbm %s2, %s3251
          %s3254 = sshll.u32 %s3231, 4
          %s3255 = int_to_ptr.vmem [resolvable:$true] %s3254
          %3257 = dma.vmem_to_hbm [thread:$0]  %s3255, 16, %s3252, %s3229
        $region44: #{tpu_custom_call.1} parent=23 // pred_fallthru
          _
      $region24: #{tpu_custom_call.1} parent=5 // pred_fallthru
        _
      %p3258 = scmp.le.s32.totalorder 2, %s18
      // Predicated region
      $region45: #{tpu_custom_call.1} parent=5 // pred_check
        %p3259 = pneg %p3258
      $region46: #{tpu_custom_call.1} parent=5 // pred_check_branch
        %3261 = sbr.rel (%p3259) target = $region48
      $region47: #{tpu_custom_call.1} parent=5 // pred_region
        %s3262 = ssub.s32 %s18, 2
        // Predicated region
        $region49: #{tpu_custom_call.1} parent=47 // pred_check
          %p3263 = pneg %p87
        $region50: #{tpu_custom_call.1} parent=47 // pred_check_branch
          %3265 = sbr.rel (%p3263) target = $region52
        $region51: #{tpu_custom_call.1} parent=47 // pred_region
          %s3266 = sand.u32 %s72, 1
          %s3267 = scalar_lea.sflag [#allocation4], %s3266
          %s3268 = sand.u32 %s72, 1
          %s3269 = scalar_lea.vmem [#allocation5], %s3268
          %3270 = dma.done %s3267, 16
        $region52: #{tpu_custom_call.1} parent=47 // pred_fallthru
          _
        // Predicated region
        $region53: #{tpu_custom_call.1} parent=47 // pred_check
          %p3271 = pneg %p113
        $region54: #{tpu_custom_call.1} parent=47 // pred_check_branch
          %3273 = sbr.rel (%p3271) target = $region56
        $region55: #{tpu_custom_call.1} parent=47 // pred_region
          %s3274 = sand.u32 %s98, 1
          %s3275 = scalar_lea.sflag [#allocation7], %s3274
          %s3276 = sand.u32 %s98, 1
          %s3277 = scalar_lea.vmem [#allocation6], %s3276
          %3278 = dma.done %s3275, 16
        $region56: #{tpu_custom_call.1} parent=47 // pred_fallthru
          _
      $region48: #{tpu_custom_call.1} parent=5 // pred_fallthru
        _
    $region6: #{tpu_custom_call.1} parent=1 // loop_footer
      %s22 = sadd.s32 1, %s18
    $region7: #{tpu_custom_call.1} parent=1 // loop_footer_branch
      %17 = sbr.rel target = $region3
    $region8: #{tpu_custom_call.1} parent=1 // loop_exit
      _
    %3279 = vsyncpa [#allocation3], 1
    %s3280 = scalar_lea.sflag [#allocation3], 1
    %3281 = vsyncpa %s3280, 1
    %3282 = vsyncpa [#allocation4], 1
    %s3283 = scalar_lea.sflag [#allocation4], 1
    %3284 = vsyncpa %s3283, 1
    %3285 = vsyncpa [#allocation7], 1
    %s3286 = scalar_lea.sflag [#allocation7], 1
    %3287 = vsyncpa %s3286, 1

</llo_original>
